<compile_context>
chip_gen: v7x
topology: tpu7x:2x2x1
jax: 0.10.0
libtpu: 0.0.40
codegen_flags: <defaults>
</compile_context>

<pallas_src>
import math
import functools

import jax
import jax.numpy as jnp
from jax.experimental import pallas as pl
from jax.experimental.pallas import tpu as pltpu


def _gcn_kernel(inp_ref, adj_ref, w_ref, b_ref, out_ref, h_ref, *,
                is_relu, average):
    # inp_ref: (N, H_in)      adj_ref: (tm, N)     w_ref: (H_in, H_out)
    # b_ref:   (1, H_out)     out_ref: (tm, H_out) h_ref: (N, H_out) scratch

    # Linear layer once per batch (row-tile index 0), cached in VMEM scratch.
    # Note: with concatenate=True (H_out = H_in // 2) this order also
    # contracts adj against the *narrower* feature width, which is optimal.
    @pl.when(pl.program_id(1) == 0)
    def _():
        h_ref[...] = (
            jnp.dot(inp_ref[...], w_ref[...],
                    preferred_element_type=jnp.float32)
            + b_ref[...]
        )

    adj = adj_ref[...]                                        # (tm, N)

    # Graph propagation for this row tile (MXU).
    out = jnp.dot(adj, h_ref[...],
                  preferred_element_type=jnp.float32)         # (tm, H_out)

    if average:
        # torch: margin_sum[margin_sum == 0] = 1  (only exact zeros replaced)
        margin = jnp.sum(adj, axis=1, keepdims=True)          # (tm, 1)
        margin = jnp.where(margin == 0.0, 1.0, margin)
        out = out * pl.reciprocal(margin, approx=True)        # EUP, ~free

    if is_relu:
        # leaky_relu, default negative_slope=0.01
        out = jnp.where(out > 0.0, out, 0.01 * out)

    out_ref[...] = out.astype(out_ref.dtype)


def _pick_row_tile(n):
    # >=128 rows per MXU issue when possible; cap at 256 so the adjacency
    # tile (double-buffered: 2 * tm * N * 4 bytes) stays well inside VMEM
    # even on v7x (64 MiB physical).
    for tm in (256, 128):
        if n % tm == 0:
            return tm
    return n  # full extent is always a legal block shape


def gcn_forward(inp, adj, weight, bias, *, is_relu=True, average=False):
    """inp: (B, N, H_in), adj: (B, N, N), weight: (H_out, H_in), bias: (H_out,)."""
    B, N, H_in = inp.shape
    H_out = weight.shape[0]

    w_t = jnp.asarray(weight).T              # (H_in, H_out) for in-kernel x @ W
    b2d = jnp.asarray(bias).reshape(1, H_out)

    tm = _pick_row_tile(N)
    num_row_tiles = N // tm

    kernel = functools.partial(_gcn_kernel, is_relu=is_relu, average=average)

    return pl.pallas_call(
        kernel,
        out_shape=jax.ShapeDtypeStruct((B, N, H_out), jnp.float32),
        grid_spec=pltpu.PrefetchScalarGridSpec(
            num_scalar_prefetch=0,
            grid=(B, num_row_tiles),
            in_specs=[
                # Full (N, H_in) input per batch; block index only changes
                # with b, so it is DMA'd once per batch, not per row tile.
                pl.BlockSpec((pl.Squeezed(), N, H_in), lambda b, r: (b, 0, 0)),
                # Row tile of the adjacency: the dominant HBM stream.
                pl.BlockSpec((pl.Squeezed(), tm, N), lambda b, r: (b, r, 0)),
                pl.BlockSpec((H_in, H_out), lambda b, r: (0, 0)),
                pl.BlockSpec((1, H_out), lambda b, r: (0, 0)),
            ],
            out_specs=pl.BlockSpec((pl.Squeezed(), tm, H_out),
                                   lambda b, r: (b, r, 0)),
            scratch_shapes=[pltpu.VMEM((N, H_out), jnp.float32)],
        ),
        compiler_params=pltpu.CompilerParams(
            dimension_semantics=("parallel", "arbitrary"),
            vmem_limit_bytes=64 * 1024 * 1024,
        ),
    )(inp, adj, w_t, b2d)


def _reference(inp, adj, weight, bias, *, is_relu, average):
    hp = jax.lax.Precision.HIGHEST
    h = jnp.matmul(inp, weight.T, precision=hp) + bias
    out = jnp.einsum("bij,bjh->bih", adj, h, precision=hp)
    if average:
        ms = jnp.sum(adj, axis=2)
        ms = jnp.where(ms == 0.0, 1.0, ms)
        out = out / ms[..., None]
    if is_relu:
        out = jnp.where(out > 0.0, out, 0.01 * out)
    return out


if __name__ == "__main__":
    # Small but lane/MXU-friendly shapes consistent with the module:
    #   batch B=2, nodes N=512, hid_size H=128, concatenate=False -> H_out=128.
    # tm=256 => grid=(2, 2): exercises both the per-batch scratch reuse and
    # megacore-parallel batch axis, with a lane-dense (128-multiple) output.
    B, N, H = 2, 512, 128

    key = jax.random.PRNGKey(0)
    k_inp, k_adj, k_w, k_b = jax.random.split(key, 4)

    inp = jax.random.normal(k_inp, (B, N, H), dtype=jnp.float32)

    # Sparse-ish nonnegative "adjacency"; force one empty row per batch to
    # exercise the margin_sum == 0 -> 1 branch of the averaging path.
    adj = jax.random.uniform(k_adj, (B, N, N), dtype=jnp.float32)
    adj = jnp.where(adj > 0.5, adj, 0.0)
    adj = adj.at[:, 0, :].set(0.0)

    # Deterministic parameter init matching GCN.init(): uniform(-stdv, stdv).
    stdv = 1.0 / math.sqrt(H // 2)
    weight = jax.random.uniform(k_w, (H, H), minval=-stdv, maxval=stdv,
                                dtype=jnp.float32)
    bias = jax.random.uniform(k_b, (H,), minval=-stdv, maxval=stdv,
                              dtype=jnp.float32)

    # Path 1: is_relu=True, average=False (default forward call pattern).
    out1 = jax.block_until_ready(
        gcn_forward(inp, adj, weight, bias, is_relu=True, average=False))
    ref1 = _reference(inp, adj, weight, bias, is_relu=True, average=False)
    assert jnp.allclose(out1, ref1, atol=1e-3, rtol=1e-3), \
        "mismatch vs reference (average=False)"

    # Path 2: averaging path (looser tolerance: EUP approx reciprocal).
    out2 = jax.block_until_ready(
        gcn_forward(inp, adj, weight, bias, is_relu=True, average=True))
    ref2 = _reference(inp, adj, weight, bias, is_relu=True, average=True)
    assert jnp.allclose(out2, ref2, atol=2e-3, rtol=2e-3), \
        "mismatch vs reference (average=True)"

    print("KERNEL_OK")
</pallas_src>

<mosaic_0001>
module attributes {stable_mosaic.version = 11 : i64} {
  func.func @_gcn_kernel(%arg0: i32, %arg1: i32, %arg2: memref<1x512x128xf32, #tpu.memory_space<vmem>>, %arg3: memref<1x256x512xf32, #tpu.memory_space<vmem>>, %arg4: memref<128x128xf32, #tpu.memory_space<vmem>>, %arg5: memref<1x128xf32, #tpu.memory_space<vmem>>, %arg6: memref<1x256x128xf32, #tpu.memory_space<vmem>>, %arg7: memref<512x128xf32, #tpu.memory_space<vmem>>) attributes {dimension_semantics = [#tpu.dimension_semantics<parallel>, #tpu.dimension_semantics<arbitrary>], iteration_bounds = array<i64: 2, 2>, scalar_prefetch = 0 : i64, scratch_operands = 1 : i64, tpu.core_type = #tpu.core_type<tc>, window_params = [{transform_indices = @transform_0, window_bounds = array<i64: 1, 512, 128>}, {transform_indices = @transform_1, window_bounds = array<i64: 1, 256, 512>}, {pipeline_mode = #tpu.pipeline_mode<synchronous>, transform_indices = @transform_2, window_bounds = array<i64: 128, 128>}, {pipeline_mode = #tpu.pipeline_mode<synchronous>, transform_indices = @transform_3, window_bounds = array<i64: 1, 128>}, {transform_indices = @transform_4, window_bounds = array<i64: 1, 256, 128>}]} {
    %c0_i32 = arith.constant 0 : i32
    %0 = arith.cmpi eq, %arg1, %c0_i32 : i32
    %1 = arith.extui %0 : i1 to i32
    %c0_i32_0 = arith.constant 0 : i32
    %2 = arith.cmpi ne, %1, %c0_i32_0 : i32
    scf.if %2 {
      %c0_10 = arith.constant 0 : index
      %c0_11 = arith.constant 0 : index
      %c0_12 = arith.constant 0 : index
      %15 = vector.load %arg2[%c0_10, %c0_11, %c0_12] : memref<1x512x128xf32, #tpu.memory_space<vmem>>, vector<1x512x128xf32>
      %16 = vector.shape_cast %15 : vector<1x512x128xf32> to vector<512x128xf32>
      %c0_13 = arith.constant 0 : index
      %c0_14 = arith.constant 0 : index
      %17 = vector.load %arg4[%c0_13, %c0_14] : memref<128x128xf32, #tpu.memory_space<vmem>>, vector<128x128xf32>
      %cst_15 = arith.constant dense<0.000000e+00> : vector<512x128xf32>
      %18 = tpu.matmul %16, %17, %cst_15 {dimension_numbers = #tpu.dot_dimension_numbers<[1], [0], [0], [1], [0, 0, 1, 1], [], []>} : vector<512x128xf32>, vector<128x128xf32>, vector<512x128xf32> -> vector<512x128xf32>
      %c0_16 = arith.constant 0 : index
      %c0_17 = arith.constant 0 : index
      %19 = vector.load %arg5[%c0_16, %c0_17] : memref<1x128xf32, #tpu.memory_space<vmem>>, vector<1x128xf32>
      %20 = vector.broadcast %19 : vector<1x128xf32> to vector<512x128xf32>
      %21 = arith.addf %18, %20 : vector<512x128xf32>
      %c0_18 = arith.constant 0 : index
      %c0_19 = arith.constant 0 : index
      %22 = vector.load %arg7[%c0_18, %c0_19] : memref<512x128xf32, #tpu.memory_space<vmem>>, vector<512x128xf32>
      tpu.vector_store %arg7[%c0_18, %c0_19], %21 {strides = array<i32>} : memref<512x128xf32, #tpu.memory_space<vmem>>, vector<512x128xf32>,
    } else {
    }
    %c0 = arith.constant 0 : index
    %c0_1 = arith.constant 0 : index
    %c0_2 = arith.constant 0 : index
    %3 = vector.load %arg3[%c0, %c0_1, %c0_2] : memref<1x256x512xf32, #tpu.memory_space<vmem>>, vector<1x256x512xf32>
    %4 = vector.shape_cast %3 : vector<1x256x512xf32> to vector<256x512xf32>
    %c0_3 = arith.constant 0 : index
    %c0_4 = arith.constant 0 : index
    %5 = vector.load %arg7[%c0_3, %c0_4] : memref<512x128xf32, #tpu.memory_space<vmem>>, vector<512x128xf32>
    %cst = arith.constant dense<0.000000e+00> : vector<256x128xf32>
    %6 = tpu.matmul %4, %5, %cst {dimension_numbers = #tpu.dot_dimension_numbers<[1], [0], [0], [1], [0, 0, 1, 1], [], []>} : vector<256x512xf32>, vector<512x128xf32>, vector<256x128xf32> -> vector<256x128xf32>
    %cst_5 = arith.constant 0.000000e+00 : f32
    %7 = vector.broadcast %cst_5 : f32 to vector<256x128xf32>
    %8 = arith.cmpf ogt, %6, %7 : vector<256x128xf32>
    %cst_6 = arith.constant 0.00999999977 : f32
    %9 = vector.broadcast %cst_6 : f32 to vector<256x128xf32>
    %10 = arith.mulf %9, %6 : vector<256x128xf32>
    %11 = arith.select %8, %6, %10 : vector<256x128xi1>, vector<256x128xf32>
    %c0_7 = arith.constant 0 : index
    %c0_8 = arith.constant 0 : index
    %c0_9 = arith.constant 0 : index
    %12 = vector.load %arg6[%c0_7, %c0_8, %c0_9] : memref<1x256x128xf32, #tpu.memory_space<vmem>>, vector<1x256x128xf32>
    %13 = vector.shape_cast %12 : vector<1x256x128xf32> to vector<256x128xf32>
    %14 = vector.shape_cast %11 : vector<256x128xf32> to vector<1x256x128xf32>
    tpu.vector_store %arg6[%c0_7, %c0_8, %c0_9], %14 {strides = array<i32>} : memref<1x256x128xf32, #tpu.memory_space<vmem>>, vector<1x256x128xf32>,
    return
  }
  func.func @transform_0(%arg0: i32, %arg1: i32) -> (i32, i32, i32) {
    %c0_i32 = arith.constant 0 : i32
    %c0_i32_0 = arith.constant 0 : i32
    %c0_i32_1 = arith.constant 0 : i32
    return %arg0, %c0_i32, %c0_i32_0 : i32, i32, i32
  }
  func.func @transform_1(%arg0: i32, %arg1: i32) -> (i32, i32, i32) {
    %c0_i32 = arith.constant 0 : i32
    %c0_i32_0 = arith.constant 0 : i32
    return %arg0, %arg1, %c0_i32 : i32, i32, i32
  }
  func.func @transform_2(%arg0: i32, %arg1: i32) -> (i32, i32) {
    %c0_i32 = arith.constant 0 : i32
    %c0_i32_0 = arith.constant 0 : i32
    %c0_i32_1 = arith.constant 0 : i32
    return %c0_i32, %c0_i32_0 : i32, i32
  }
  func.func @transform_3(%arg0: i32, %arg1: i32) -> (i32, i32) {
    %c0_i32 = arith.constant 0 : i32
    %c0_i32_0 = arith.constant 0 : i32
    %c0_i32_1 = arith.constant 0 : i32
    return %c0_i32, %c0_i32_0 : i32, i32
  }
  func.func @transform_4(%arg0: i32, %arg1: i32) -> (i32, i32, i32) {
    %c0_i32 = arith.constant 0 : i32
    %c0_i32_0 = arith.constant 0 : i32
    return %arg0, %arg1, %c0_i32 : i32, i32, i32
  }
}

</mosaic_0001>

<llo_original>
// kernel: tpu_custom_call.1
$region0: #{tpu_custom_call.1}
  #allocation0 [shape = 'u32[]', space=smem, size = 0x4, offset = 0x4, fixed_abs, tag = 'smem constant byte address 0x4 - core index']
  #allocation1 [shape = 'u32[144,128]{1,0:T(1,128)}', space=vmem, size = 0x12000, scoped, tag = 'internal scratch']
  #allocation2 [shape = 'f32[512,128]{1,0:T(8,128)}', space=vmem, size = 0x40000, scoped, tag = 'scratch operand']
  %s0 = inlined_call_operand.hbm [shape: f32[2,512,128], index: 0, kind: input, shape index: {}]
  %s1 = inlined_call_operand.hbm [shape: f32[2,512,512], index: 1, kind: input, shape index: {}]
  %s2 = inlined_call_operand.hbm [shape: f32[128,128], index: 2, kind: input, shape index: {}]
  %s3 = inlined_call_operand.hbm [shape: f32[1,128], index: 3, kind: input, shape index: {}]
  %s4 = inlined_call_operand.hbm [shape: f32[2,512,128], index: 4, kind: output, shape index: {}]
  %s5 = sld [smem:[#allocation0]]
  $region69: #{tpu_custom_call.1} parent=0
    _
  %s7 = ssub.s32 1, %s5
  %s8 = scalar_select 0, %s7, %s5
  $region1: #{tpu_custom_call.1} parent=0
    #allocation3 [shape = 'u8[524288]{0}', space=vmem, size = 0x80000, scoped, tag = 'input window, operand 0']
    #allocation4 [shape = 's32[2]{0}', space=sflag, size = 0x8, scoped, tag = 'scoped memory for tpu_custom_call.1']
    #allocation5 [shape = 's32[2]{0}', space=sflag, size = 0x8, scoped, tag = 'scoped memory for tpu_custom_call.1']
    #allocation6 [shape = 'u8[1048576]{0}', space=vmem, size = 0x100000, scoped, tag = 'input window, operand 1']
    #allocation7 [shape = 's32[2]{0}', space=sflag, size = 0x8, scoped, tag = 'scoped memory for tpu_custom_call.1']
    #allocation8 [shape = 'u8[65536]{0}', space=vmem, size = 0x10000, scoped, tag = 'input window, operand 2, single buffered']
    #allocation9 [shape = 'u8[512]{0}', space=vmem, size = 0x400, scoped, tag = 'input window, operand 3, single buffered']
    #allocation10 [shape = 's32[1]{0}', space=sflag, size = 0x4, scoped, tag = 'scoped memory for tpu_custom_call.1']
    #allocation11 [shape = 'u8[262144]{0}', space=vmem, size = 0x40000, scoped, tag = 'output window, operand 0']
    %9 = vsyncpa [#allocation4], 0
    %s10 = scalar_lea.sflag [#allocation4], 1
    %11 = vsyncpa %s10, 0
    %12 = vsyncpa [#allocation7], 0
    %s13 = scalar_lea.sflag [#allocation7], 1
    %14 = vsyncpa %s13, 0
    %15 = vsyncpa [#allocation10], 0
    %16 = vsyncpa [#allocation5], 0
    %s17 = scalar_lea.sflag [#allocation5], 1
    %18 = vsyncpa %s17, 0
    loop: start=0, step=1, limit=6
    $region2: #{tpu_custom_call.1} parent=1 // loop_pre_header
      _
    $region3: #{tpu_custom_call.1} parent=1 // loop_header
      %s20 = sphi 0, %s24
      %p21 = scmp.ge.s32.totalorder %s20, 6
      %s27 = sphi 0, %s39
      %s28 = sphi 0, %s35
      %s29 = sphi 0, %s27
      %s30 = sphi 0, %s28
      %s31 = sphi 0, %s29
      %s32 = sphi 0, %s30
      %s42 = sphi 0, %s44
      %s45 = sphi 0, %s42
      %s46 = sphi 0, %s45
      %s62 = sphi 0, %s46
      %s70 = sphi 0, %s72
      %s73 = sphi 0, %s70
      %s74 = sphi 0, %s73
      %s90 = sphi 0, %s74
      %s94 = sphi 0, %s94
      %s96 = sphi 0, %s94
      %s97 = sphi 0, %s96
      %s111 = sphi 0, %s97
      %s115 = sphi 0, %s115
      %s117 = sphi 0, %s115
      %s118 = sphi 0, %s117
      %s132 = sphi 0, %s118
      %s140 = sphi 0, %s142
      %s143 = sphi 0, %s140
      %s144 = sphi 0, %s143
      %s160 = sphi 0, %s144
    $region4: #{tpu_custom_call.1} parent=1 // loop_header_branch
      %23 = sbr.rel (%p21) target = $region8
    $region5: #{tpu_custom_call.1} parent=1 // loop_body
      %s25 = ssub.s32 %s20, 1
      %s26 = ssub.s32 %s20, 2
      %s33 = sadd.s32 1, %s28
      %p34 = scmp.ge.s32.totalorder %s33, 2
      %s35 = scalar_select %p34, 0, %s33
      %s36 = sadd.s32 1, %s27
      %s37 = scalar_select %p34, %s36, %s27
      %p38 = scmp.ge.s32.totalorder %s37, 2
      %s39 = scalar_select %p38, 0, %s37
      %s40 = ssub.s32 %s27, %s39
      %p41 = scmp.eq.s32.totalorder %s40, 0
      %s43 = sadd.s32 %s42, 1
      %s44 = scalar_select %p41, %s42, %s43
      %p47 = pneg %p41
      %p48 = scmp.eq.s32.totalorder %s20, 3
      %p49 = por %p47, %p48
      %p50 = scmp.ne.s32.totalorder %s42, %s45
      %p51 = scmp.eq.s32.totalorder %s20, 0
      %p52 = por %p50, %p51
      %p53 = scmp.ne.s32.totalorder %s42, %s45
      %p54 = scmp.eq.s32.totalorder %s25, 3
      %p55 = por %p53, %p54
      %p56 = scmp.ne.s32.totalorder %s45, %s46
      %p57 = scmp.eq.s32.totalorder %s25, 0
      %p58 = por %p56, %p57
      %p59 = scmp.ne.s32.totalorder %s45, %s46
      %p60 = scmp.eq.s32.totalorder %s26, 3
      %p61 = por %p59, %p60
      %p63 = scmp.ne.s32.totalorder %s46, %s62
      %p64 = scmp.eq.s32.totalorder %s26, 0
      %p65 = por %p63, %p64
      %s66 = ssub.s32 %s27, %s39
      %s67 = ssub.s32 %s28, %s35
      %s68 = sor.u32 %s66, %s67
      %p69 = scmp.eq.s32.totalorder %s68, 0
      %s71 = sadd.s32 %s70, 1
      %s72 = scalar_select %p69, %s70, %s71
      %p75 = pneg %p69
      %p76 = scmp.eq.s32.totalorder %s20, 3
      %p77 = por %p75, %p76
      %p78 = scmp.ne.s32.totalorder %s70, %s73
      %p79 = scmp.eq.s32.totalorder %s20, 0
      %p80 = por %p78, %p79
      %p81 = scmp.ne.s32.totalorder %s70, %s73
      %p82 = scmp.eq.s32.totalorder %s25, 3
      %p83 = por %p81, %p82
      %p84 = scmp.ne.s32.totalorder %s73, %s74
      %p85 = scmp.eq.s32.totalorder %s25, 0
      %p86 = por %p84, %p85
      %p87 = scmp.ne.s32.totalorder %s73, %s74
      %p88 = scmp.eq.s32.totalorder %s26, 3
      %p89 = por %p87, %p88
      %p91 = scmp.ne.s32.totalorder %s74, %s90
      %p92 = scmp.eq.s32.totalorder %s26, 0
      %p93 = por %p91, %p92
      %s95 = sadd.s32 %s94, 1
      %p98 = scmp.eq.s32.totalorder %s20, 3
      %p99 = scmp.ne.s32.totalorder %s94, %s96
      %p100 = scmp.eq.s32.totalorder %s20, 0
      %p101 = por %p99, %p100
      %p102 = scmp.ne.s32.totalorder %s94, %s96
      %p103 = scmp.eq.s32.totalorder %s25, 3
      %p104 = por %p102, %p103
      %p105 = scmp.ne.s32.totalorder %s96, %s97
      %p106 = scmp.eq.s32.totalorder %s25, 0
      %p107 = por %p105, %p106
      %p108 = scmp.ne.s32.totalorder %s96, %s97
      %p109 = scmp.eq.s32.totalorder %s26, 3
      %p110 = por %p108, %p109
      %p112 = scmp.ne.s32.totalorder %s97, %s111
      %p113 = scmp.eq.s32.totalorder %s26, 0
      %p114 = por %p112, %p113
      %s116 = sadd.s32 %s115, 1
      %p119 = scmp.eq.s32.totalorder %s20, 3
      %p120 = scmp.ne.s32.totalorder %s115, %s117
      %p121 = scmp.eq.s32.totalorder %s20, 0
      %p122 = por %p120, %p121
      %p123 = scmp.ne.s32.totalorder %s115, %s117
      %p124 = scmp.eq.s32.totalorder %s25, 3
      %p125 = por %p123, %p124
      %p126 = scmp.ne.s32.totalorder %s117, %s118
      %p127 = scmp.eq.s32.totalorder %s25, 0
      %p128 = por %p126, %p127
      %p129 = scmp.ne.s32.totalorder %s117, %s118
      %p130 = scmp.eq.s32.totalorder %s26, 3
      %p131 = por %p129, %p130
      %p133 = scmp.ne.s32.totalorder %s118, %s132
      %p134 = scmp.eq.s32.totalorder %s26, 0
      %p135 = por %p133, %p134
      %s136 = ssub.s32 %s27, %s39
      %s137 = ssub.s32 %s28, %s35
      %s138 = sor.u32 %s136, %s137
      %p139 = scmp.eq.s32.totalorder %s138, 0
      %s141 = sadd.s32 %s140, 1
      %s142 = scalar_select %p139, %s140, %s141
      %p145 = pneg %p139
      %p146 = scmp.eq.s32.totalorder %s20, 3
      %p147 = por %p145, %p146
      %p148 = scmp.ne.s32.totalorder %s140, %s143
      %p149 = scmp.eq.s32.totalorder %s20, 0
      %p150 = por %p148, %p149
      %p151 = scmp.ne.s32.totalorder %s140, %s143
      %p152 = scmp.eq.s32.totalorder %s25, 3
      %p153 = por %p151, %p152
      %p154 = scmp.ne.s32.totalorder %s143, %s144
      %p155 = scmp.eq.s32.totalorder %s25, 0
      %p156 = por %p154, %p155
      %p157 = scmp.ne.s32.totalorder %s143, %s144
      %p158 = scmp.eq.s32.totalorder %s26, 3
      %p159 = por %p157, %p158
      %p161 = scmp.ne.s32.totalorder %s144, %s160
      %p162 = scmp.eq.s32.totalorder %s26, 0
      %p163 = por %p161, %p162
      %p164 = scmp.le.s32.totalorder 1, %s20
      %p165 = scmp.lt.s32.totalorder %s20, 5
      %p166 = pnand %p164, %p165
      %p167 = pneg %p166
      // Predicated region
      $region9: #{tpu_custom_call.1} parent=5 // pred_check
        _
      $region10: #{tpu_custom_call.1} parent=5 // pred_check_branch
        %169 = sbr.rel (%p166) target = $region12
      $region11: #{tpu_custom_call.1} parent=5 // pred_region
        %s170 = ssub.s32 %s20, 1
        // Predicated region
        $region13: #{tpu_custom_call.1} parent=11 // pred_check
          %p171 = pneg %p107
        $region14: #{tpu_custom_call.1} parent=11 // pred_check_branch
          %173 = sbr.rel (%p171) target = $region16
        $region15: #{tpu_custom_call.1} parent=11 // pred_region
          %s175 = ssub.s32 2048, 2048
          %176 = vsyncadd [#allocation7], %s175
          %s177 = sshll.u32 [#allocation8], 4
          %s178 = int_to_ptr.vmem [resolvable:$true] %s177
          %183 = dma.hbm_to_vmem [thread:$0]  %s2, 2048, %s178, [#allocation7], 128, 128, 8
        $region16: #{tpu_custom_call.1} parent=11 // pred_fallthru
          _
        // Predicated region
        $region17: #{tpu_custom_call.1} parent=11 // pred_check
          %p184 = pneg %p128
        $region18: #{tpu_custom_call.1} parent=11 // pred_check_branch
          %186 = sbr.rel (%p184) target = $region20
        $region19: #{tpu_custom_call.1} parent=11 // pred_region
          %s188 = ssub.s32 16, 16
          %189 = vsyncadd [#allocation10], %s188
          %s191 = sshll.u32 [#allocation9], 4
          %s192 = int_to_ptr.vmem [resolvable:$true] %s191
          %194 = dma.hbm_to_vmem [thread:$0]  %s3, 16, %s192, [#allocation10]
        $region20: #{tpu_custom_call.1} parent=11 // pred_fallthru
          _
      $region12: #{tpu_custom_call.1} parent=5 // pred_fallthru
        _
      %p195 = scmp.lt.s32.totalorder %s20, 4
      // Predicated region
      $region21: #{tpu_custom_call.1} parent=5 // pred_check
        %p196 = pneg %p195
      $region22: #{tpu_custom_call.1} parent=5 // pred_check_branch
        %198 = sbr.rel (%p196) target = $region24
      $region23: #{tpu_custom_call.1} parent=5 // pred_region
        // Predicated region
        $region25: #{tpu_custom_call.1} parent=23 // pred_check
          %p199 = pneg %p52
        $region26: #{tpu_custom_call.1} parent=23 // pred_check_branch
          %201 = sbr.rel (%p199) target = $region28
        $region27: #{tpu_custom_call.1} parent=23 // pred_region
          %s202 = sand.u32 %s42, 1
          %s203 = scalar_lea.sflag [#allocation4], %s202
          %s204 = sand.u32 %s42, 1
          %s205 = smul.addr %s204, 512
          %s206 = scalar_lea.vmem [#allocation3], %s205
          %s208 = ssub.s32 8192, 8192
          %209 = vsyncadd %s203, %s208
          %s210 = smul.addr %s27, 64
          %s211 = smul.addr %s210, 128
          %s212 = scalar_lea.hbm %s0, %s211
          %s213 = sshll.u32 %s206, 4
          %s214 = int_to_ptr.vmem [resolvable:$true] %s213
          %219 = dma.hbm_to_vmem [thread:$0]  %s212, 8192, %s214, %s203, 128, 128, 8
        $region28: #{tpu_custom_call.1} parent=23 // pred_fallthru
          _
        // Predicated region
        $region29: #{tpu_custom_call.1} parent=23 // pred_check
          %p220 = pneg %p80
        $region30: #{tpu_custom_call.1} parent=23 // pred_check_branch
          %222 = sbr.rel (%p220) target = $region32
        $region31: #{tpu_custom_call.1} parent=23 // pred_region
          %s223 = sand.u32 %s20, 1
          %s224 = scalar_lea.sflag [#allocation7], %s223
          %s225 = sand.u32 %s70, 1
          %s226 = smul.addr %s225, 1024
          %s227 = scalar_lea.vmem [#allocation6], %s226
          %s228 = smul.u32 32, %s28
          %s230 = ssub.s32 16384, 16384
          %231 = vsyncadd %s224, %s230
          %s232 = smul.addr %s228, 4
          %s233 = smul.addr %s27, 256
          %s234 = sadd.s32 %s232, %s233
          %s235 = smul.addr %s234, 128
          %s236 = scalar_lea.hbm %s1, %s235
          %s237 = sshll.u32 %s227, 4
          %s238 = int_to_ptr.vmem [resolvable:$true] %s237
          %243 = dma.hbm_to_vmem [thread:$0]  %s236, 16384, %s238, %s224, 512, 512, 32
        $region32: #{tpu_custom_call.1} parent=23 // pred_fallthru
          _
      $region24: #{tpu_custom_call.1} parent=5 // pred_fallthru
        _
      %p244 = scmp.le.s32.totalorder 1, %s20
      %p245 = scmp.lt.s32.totalorder %s20, 5
      %p246 = pnand %p244, %p245
      %p247 = pneg %p246
      // Predicated region
      $region33: #{tpu_custom_call.1} parent=5 // pred_check
        _
      $region34: #{tpu_custom_call.1} parent=5 // pred_check_branch
        %249 = sbr.rel (%p246) target = $region36
      $region35: #{tpu_custom_call.1} parent=5 // pred_region
        %s250 = ssub.s32 %s20, 1
        %s251 = sand.u32 %s45, 1
        %s252 = scalar_lea.sflag [#allocation4], %s251
        %s253 = sand.u32 %s45, 1
        %s254 = smul.addr %s253, 512
        %s255 = scalar_lea.vmem [#allocation3], %s254
        // Predicated region
        $region37: #{tpu_custom_call.1} parent=35 // pred_check
          %p256 = pneg %p58
        $region38: #{tpu_custom_call.1} parent=35 // pred_check_branch
          %258 = sbr.rel (%p256) target = $region40
        $region39: #{tpu_custom_call.1} parent=35 // pred_region
          %259 = dma.done %s252, 8192
        $region40: #{tpu_custom_call.1} parent=35 // pred_fallthru
          _
        %s260 = sand.u32 %s25, 1
        %s261 = scalar_lea.sflag [#allocation7], %s260
        %s262 = sand.u32 %s73, 1
        %s263 = smul.addr %s262, 1024
        %s264 = scalar_lea.vmem [#allocation6], %s263
        // Predicated region
        $region41: #{tpu_custom_call.1} parent=35 // pred_check
          %p265 = pneg %p86
        $region42: #{tpu_custom_call.1} parent=35 // pred_check_branch
          %267 = sbr.rel (%p265) target = $region44
        $region43: #{tpu_custom_call.1} parent=35 // pred_region
          %268 = dma.done %s261, 16384
        $region44: #{tpu_custom_call.1} parent=35 // pred_fallthru
          _
        // Predicated region
        $region45: #{tpu_custom_call.1} parent=35 // pred_check
          %p269 = pneg %p107
        $region46: #{tpu_custom_call.1} parent=35 // pred_check_branch
          %271 = sbr.rel (%p269) target = $region48
        $region47: #{tpu_custom_call.1} parent=35 // pred_region
          %272 = dma.done [#allocation7], 2048
        $region48: #{tpu_custom_call.1} parent=35 // pred_fallthru
          _
        // Predicated region
        $region49: #{tpu_custom_call.1} parent=35 // pred_check
          %p273 = pneg %p128
        $region50: #{tpu_custom_call.1} parent=35 // pred_check_branch
          %275 = sbr.rel (%p273) target = $region52
        $region51: #{tpu_custom_call.1} parent=35 // pred_region
          %276 = dma.done [#allocation10], 16
        $region52: #{tpu_custom_call.1} parent=35 // pred_fallthru
          _
        %s277 = sand.u32 %s45, 1
        %s278 = scalar_lea.sflag [#allocation4], %s277
        %s279 = sand.u32 %s45, 1
        %s280 = smul.addr %s279, 512
        %s281 = scalar_lea.vmem [#allocation3], %s280
        %p282 = pneg %p58
        %p283 = pneg %p55
        %s284 = sand.u32 %s25, 1
        %s285 = scalar_lea.sflag [#allocation7], %s284
        %s286 = sand.u32 %s73, 1
        %s287 = smul.addr %s286, 1024
        %s288 = scalar_lea.vmem [#allocation6], %s287
        %p289 = pneg %p86
        %p290 = pneg %p83
        %p291 = pneg %p107
        %p292 = pneg %p104
        %p293 = pneg %p128
        %p294 = pneg %p125
        %p295 = pneg %p156
        %p296 = pneg %p153
        %s297 = sand.u32 %s143, 1
        %s298 = scalar_lea.sflag [#allocation5], %s297
        %s299 = sand.u32 %s143, 1
        %s300 = smul.addr %s299, 256
        %s301 = scalar_lea.vmem [#allocation11], %s300
        %s302 = smul.u32 32, %s30
        %s303 = smul.u32 32, %s30
        %p304 = scmp.eq.s32.totalorder %s30, 0
        // Predicated region
        $region53: #{tpu_custom_call.1} parent=35 // pred_check
          %p305 = pneg %p304
        $region54: #{tpu_custom_call.1} parent=35 // pred_check_branch
          %307 = sbr.rel (%p305) target = $region56
        $region55: #{tpu_custom_call.1} parent=35 // pred_region
          %v308 = vld [vmem:[%s255] sm:$0xff]
          %v309 = vld [vmem:[%s255 + $0x8] sm:$0xff]
          %v310 = vld [vmem:[%s255 + $0x10] sm:$0xff]
          %v311 = vld [vmem:[%s255 + $0x18] sm:$0xff]
          %v312 = vld [vmem:[%s255 + $0x20] sm:$0xff]
          %v313 = vld [vmem:[%s255 + $0x28] sm:$0xff]
          %v314 = vld [vmem:[%s255 + $0x30] sm:$0xff]
          %v315 = vld [vmem:[%s255 + $0x38] sm:$0xff]
          %v316 = vld [vmem:[%s255 + $0x40] sm:$0xff]
          %v317 = vld [vmem:[%s255 + $0x48] sm:$0xff]
          %v318 = vld [vmem:[%s255 + $0x50] sm:$0xff]
          %v319 = vld [vmem:[%s255 + $0x58] sm:$0xff]
          %v320 = vld [vmem:[%s255 + $0x60] sm:$0xff]
          %v321 = vld [vmem:[%s255 + $0x68] sm:$0xff]
          %v322 = vld [vmem:[%s255 + $0x70] sm:$0xff]
          %v323 = vld [vmem:[%s255 + $0x78] sm:$0xff]
          %v324 = vld [vmem:[%s255 + $0x80] sm:$0xff]
          %v325 = vld [vmem:[%s255 + $0x88] sm:$0xff]
          %v326 = vld [vmem:[%s255 + $0x90] sm:$0xff]
          %v327 = vld [vmem:[%s255 + $0x98] sm:$0xff]
          %v328 = vld [vmem:[%s255 + $0xa0] sm:$0xff]
          %v329 = vld [vmem:[%s255 + $0xa8] sm:$0xff]
          %v330 = vld [vmem:[%s255 + $0xb0] sm:$0xff]
          %v331 = vld [vmem:[%s255 + $0xb8] sm:$0xff]
          %v332 = vld [vmem:[%s255 + $0xc0] sm:$0xff]
          %v333 = vld [vmem:[%s255 + $0xc8] sm:$0xff]
          %v334 = vld [vmem:[%s255 + $0xd0] sm:$0xff]
          %v335 = vld [vmem:[%s255 + $0xd8] sm:$0xff]
          %v336 = vld [vmem:[%s255 + $0xe0] sm:$0xff]
          %v337 = vld [vmem:[%s255 + $0xe8] sm:$0xff]
          %v338 = vld [vmem:[%s255 + $0xf0] sm:$0xff]
          %v339 = vld [vmem:[%s255 + $0xf8] sm:$0xff]
          %v340 = vld [vmem:[%s255 + $0x100] sm:$0xff]
          %v341 = vld [vmem:[%s255 + $0x108] sm:$0xff]
          %v342 = vld [vmem:[%s255 + $0x110] sm:$0xff]
          %v343 = vld [vmem:[%s255 + $0x118] sm:$0xff]
          %v344 = vld [vmem:[%s255 + $0x120] sm:$0xff]
          %v345 = vld [vmem:[%s255 + $0x128] sm:$0xff]
          %v346 = vld [vmem:[%s255 + $0x130] sm:$0xff]
          %v347 = vld [vmem:[%s255 + $0x138] sm:$0xff]
          %v348 = vld [vmem:[%s255 + $0x140] sm:$0xff]
          %v349 = vld [vmem:[%s255 + $0x148] sm:$0xff]
          %v350 = vld [vmem:[%s255 + $0x150] sm:$0xff]
          %v351 = vld [vmem:[%s255 + $0x158] sm:$0xff]
          %v352 = vld [vmem:[%s255 + $0x160] sm:$0xff]
          %v353 = vld [vmem:[%s255 + $0x168] sm:$0xff]
          %v354 = vld [vmem:[%s255 + $0x170] sm:$0xff]
          %v355 = vld [vmem:[%s255 + $0x178] sm:$0xff]
          %v356 = vld [vmem:[%s255 + $0x180] sm:$0xff]
          %v357 = vld [vmem:[%s255 + $0x188] sm:$0xff]
          %v358 = vld [vmem:[%s255 + $0x190] sm:$0xff]
          %v359 = vld [vmem:[%s255 + $0x198] sm:$0xff]
          %v360 = vld [vmem:[%s255 + $0x1a0] sm:$0xff]
          %v361 = vld [vmem:[%s255 + $0x1a8] sm:$0xff]
          %v362 = vld [vmem:[%s255 + $0x1b0] sm:$0xff]
          %v363 = vld [vmem:[%s255 + $0x1b8] sm:$0xff]
          %v364 = vld [vmem:[%s255 + $0x1c0] sm:$0xff]
          %v365 = vld [vmem:[%s255 + $0x1c8] sm:$0xff]
          %v366 = vld [vmem:[%s255 + $0x1d0] sm:$0xff]
          %v367 = vld [vmem:[%s255 + $0x1d8] sm:$0xff]
          %v368 = vld [vmem:[%s255 + $0x1e0] sm:$0xff]
          %v369 = vld [vmem:[%s255 + $0x1e8] sm:$0xff]
          %v370 = vld [vmem:[%s255 + $0x1f0] sm:$0xff]
          %v371 = vld [vmem:[%s255 + $0x1f8] sm:$0xff]
          %v372 = vld [vmem:[#allocation8] sm:$0xff]
          %v373 = vld [vmem:[#allocation8 + $0x8] sm:$0xff]
          %v374 = vld [vmem:[#allocation8 + $0x10] sm:$0xff]
          %v375 = vld [vmem:[#allocation8 + $0x18] sm:$0xff]
          %v376 = vld [vmem:[#allocation8 + $0x20] sm:$0xff]
          %v377 = vld [vmem:[#allocation8 + $0x28] sm:$0xff]
          %v378 = vld [vmem:[#allocation8 + $0x30] sm:$0xff]
          %v379 = vld [vmem:[#allocation8 + $0x38] sm:$0xff]
          %v380 = vld [vmem:[#allocation8 + $0x40] sm:$0xff]
          %v381 = vld [vmem:[#allocation8 + $0x48] sm:$0xff]
          %v382 = vld [vmem:[#allocation8 + $0x50] sm:$0xff]
          %v383 = vld [vmem:[#allocation8 + $0x58] sm:$0xff]
          %v384 = vld [vmem:[#allocation8 + $0x60] sm:$0xff]
          %v385 = vld [vmem:[#allocation8 + $0x68] sm:$0xff]
          %v386 = vld [vmem:[#allocation8 + $0x70] sm:$0xff]
          %v387 = vld [vmem:[#allocation8 + $0x78] sm:$0xff]
          %v388 = vld [vmem:[#allocation9] sm:$0x1]
          %v390 = vlaneseq
          %v391 = vshrl.u32 %v390, 7
          %v392 = vsub.s32 0, %v391
          %v393 = vrot.slane %v388, %v392
          %395 = vmatprep.subr.mxu0 0.0
          %396 = vmatpush1.msra.mxu0 %v372
          %397 = vmatprep.subr.mxu0 0.0
          %398 = vmatpush1.msra.mxu0 %v373
          %399 = vmatprep.subr.mxu0 0.0
          %400 = vmatpush1.msra.mxu0 %v374
          %401 = vmatprep.subr.mxu0 0.0
          %402 = vmatpush1.msra.mxu0 %v375
          %403 = vmatprep.subr.mxu0 0.0
          %404 = vmatpush1.msra.mxu0 %v376
          %405 = vmatprep.subr.mxu0 0.0
          %406 = vmatpush1.msra.mxu0 %v377
          %407 = vmatprep.subr.mxu0 0.0
          %408 = vmatpush1.msra.mxu0 %v378
          %409 = vmatprep.subr.mxu0 0.0
          %410 = vmatpush1.msra.mxu0 %v379
          %411 = vmatprep.subr.mxu0 0.0
          %412 = vmatpush1.msra.mxu0 %v380
          %413 = vmatprep.subr.mxu0 0.0
          %414 = vmatpush1.msra.mxu0 %v381
          %415 = vmatprep.subr.mxu0 0.0
          %416 = vmatpush1.msra.mxu0 %v382
          %417 = vmatprep.subr.mxu0 0.0
          %418 = vmatpush1.msra.mxu0 %v383
          %419 = vmatprep.subr.mxu0 0.0
          %420 = vmatpush1.msra.mxu0 %v384
          %421 = vmatprep.subr.mxu0 0.0
          %422 = vmatpush1.msra.mxu0 %v385
          %423 = vmatprep.subr.mxu0 0.0
          %424 = vmatpush1.msra.mxu0 %v386
          %425 = vmatprep.subr.mxu0 0.0
          %426 = vmatpush1.msra.mxu0 %v387
          %427 = vmatprep.subr.mxu0 0.0
          %428 = vmatpush1.msra.mxu0 0.0
          %429 = vmatprep.subr.mxu0 0.0
          %430 = vmatpush1.msra.mxu0 0.0
          %431 = vmatprep.subr.mxu0 0.0
          %432 = vmatpush1.msra.mxu0 0.0
          %433 = vmatprep.subr.mxu0 0.0
          %434 = vmatpush1.msra.mxu0 0.0
          %435 = vmatprep.subr.mxu0 0.0
          %436 = vmatpush1.msra.mxu0 0.0
          %437 = vmatprep.subr.mxu0 0.0
          %438 = vmatpush1.msra.mxu0 0.0
          %439 = vmatprep.subr.mxu0 0.0
          %440 = vmatpush1.msra.mxu0 0.0
          %441 = vmatprep.subr.mxu0 0.0
          %442 = vmatpush1.msra.mxu0 0.0
          %443 = vmatprep.subr.mxu0 0.0
          %444 = vmatpush1.msra.mxu0 0.0
          %445 = vmatprep.subr.mxu0 0.0
          %446 = vmatpush1.msra.mxu0 0.0
          %447 = vmatprep.subr.mxu0 0.0
          %448 = vmatpush1.msra.mxu0 0.0
          %449 = vmatprep.subr.mxu0 0.0
          %450 = vmatpush1.msra.mxu0 0.0
          %451 = vmatprep.subr.mxu0 0.0
          %452 = vmatpush1.msra.mxu0 0.0
          %453 = vmatprep.subr.mxu0 0.0
          %454 = vmatpush1.msra.mxu0 0.0
          %455 = vmatprep.subr.mxu0 0.0
          %456 = vmatpush1.msra.mxu0 0.0
          %457 = vmatprep.subr.mxu0 0.0
          %458 = vmatpush1.msra.mxu0 0.0
          %459 = vmatprep.mubr.f32.mxu0 0.0
          %460 = vmatmul.mubr.f32.gmra.mrb[0].mxu0 %v308
          %v461 = vpop.f32.mrb[0].mxu0
          %v462 = vadd.f32 %v393, %v461
          %v463 = vpop.f32.mrb[0].mxu0
          %464 = vmatprep.mubr.f32.mxu0 0.0
          %465 = vmatmul.mubr.f32.gmra.mrb[0].mxu0 %v309
          %v466 = vpop.f32.mrb[0].mxu0
          %v467 = vadd.f32 %v393, %v466
          %v468 = vpop.f32.mrb[0].mxu0
          %469 = vmatprep.mubr.f32.mxu0 0.0
          %470 = vmatmul.mubr.f32.gmra.mrb[0].mxu0 %v310
          %v471 = vpop.f32.mrb[0].mxu0
          %v472 = vadd.f32 %v393, %v471
          %v473 = vpop.f32.mrb[0].mxu0
          %474 = vmatprep.mubr.f32.mxu0 0.0
          %475 = vmatmul.mubr.f32.gmra.mrb[0].mxu0 %v311
          %v476 = vpop.f32.mrb[0].mxu0
          %v477 = vadd.f32 %v393, %v476
          %v478 = vpop.f32.mrb[0].mxu0
          %479 = vmatprep.mubr.f32.mxu0 0.0
          %480 = vmatmul.mubr.f32.gmra.mrb[0].mxu0 %v312
          %v481 = vpop.f32.mrb[0].mxu0
          %v482 = vadd.f32 %v393, %v481
          %v483 = vpop.f32.mrb[0].mxu0
          %484 = vmatprep.mubr.f32.mxu0 0.0
          %485 = vmatmul.mubr.f32.gmra.mrb[0].mxu0 %v313
          %v486 = vpop.f32.mrb[0].mxu0
          %v487 = vadd.f32 %v393, %v486
          %v488 = vpop.f32.mrb[0].mxu0
          %489 = vmatprep.mubr.f32.mxu0 0.0
          %490 = vmatmul.mubr.f32.gmra.mrb[0].mxu0 %v314
          %v491 = vpop.f32.mrb[0].mxu0
          %v492 = vadd.f32 %v393, %v491
          %v493 = vpop.f32.mrb[0].mxu0
          %494 = vmatprep.mubr.f32.mxu0 0.0
          %495 = vmatmul.mubr.f32.gmra.mrb[0].mxu0 %v315
          %v496 = vpop.f32.mrb[0].mxu0
          %v497 = vadd.f32 %v393, %v496
          %v498 = vpop.f32.mrb[0].mxu0
          %499 = vmatprep.mubr.f32.mxu0 0.0
          %500 = vmatmul.mubr.f32.gmra.mrb[0].mxu0 %v316
          %v501 = vpop.f32.mrb[0].mxu0
          %v502 = vadd.f32 %v393, %v501
          %v503 = vpop.f32.mrb[0].mxu0
          %504 = vmatprep.mubr.f32.mxu0 0.0
          %505 = vmatmul.mubr.f32.gmra.mrb[0].mxu0 %v317
          %v506 = vpop.f32.mrb[0].mxu0
          %v507 = vadd.f32 %v393, %v506
          %v508 = vpop.f32.mrb[0].mxu0
          %509 = vmatprep.mubr.f32.mxu0 0.0
          %510 = vmatmul.mubr.f32.gmra.mrb[0].mxu0 %v318
          %v511 = vpop.f32.mrb[0].mxu0
          %v512 = vadd.f32 %v393, %v511
          %v513 = vpop.f32.mrb[0].mxu0
          %514 = vmatprep.mubr.f32.mxu0 0.0
          %515 = vmatmul.mubr.f32.gmra.mrb[0].mxu0 %v319
          %v516 = vpop.f32.mrb[0].mxu0
          %v517 = vadd.f32 %v393, %v516
          %v518 = vpop.f32.mrb[0].mxu0
          %519 = vmatprep.mubr.f32.mxu0 0.0
          %520 = vmatmul.mubr.f32.gmra.mrb[0].mxu0 %v320
          %v521 = vpop.f32.mrb[0].mxu0
          %v522 = vadd.f32 %v393, %v521
          %v523 = vpop.f32.mrb[0].mxu0
          %524 = vmatprep.mubr.f32.mxu0 0.0
          %525 = vmatmul.mubr.f32.gmra.mrb[0].mxu0 %v321
          %v526 = vpop.f32.mrb[0].mxu0
          %v527 = vadd.f32 %v393, %v526
          %v528 = vpop.f32.mrb[0].mxu0
          %529 = vmatprep.mubr.f32.mxu0 0.0
          %530 = vmatmul.mubr.f32.gmra.mrb[0].mxu0 %v322
          %v531 = vpop.f32.mrb[0].mxu0
          %v532 = vadd.f32 %v393, %v531
          %v533 = vpop.f32.mrb[0].mxu0
          %534 = vmatprep.mubr.f32.mxu0 0.0
          %535 = vmatmul.mubr.f32.gmra.mrb[0].mxu0 %v323
          %v536 = vpop.f32.mrb[0].mxu0
          %v537 = vadd.f32 %v393, %v536
          %v538 = vpop.f32.mrb[0].mxu0
          %539 = vmatprep.mubr.f32.mxu0 0.0
          %540 = vmatmul.mubr.f32.gmra.mrb[0].mxu0 %v324
          %v541 = vpop.f32.mrb[0].mxu0
          %v542 = vadd.f32 %v393, %v541
          %v543 = vpop.f32.mrb[0].mxu0
          %544 = vmatprep.mubr.f32.mxu0 0.0
          %545 = vmatmul.mubr.f32.gmra.mrb[0].mxu0 %v325
          %v546 = vpop.f32.mrb[0].mxu0
          %v547 = vadd.f32 %v393, %v546
          %v548 = vpop.f32.mrb[0].mxu0
          %549 = vmatprep.mubr.f32.mxu0 0.0
          %550 = vmatmul.mubr.f32.gmra.mrb[0].mxu0 %v326
          %v551 = vpop.f32.mrb[0].mxu0
          %v552 = vadd.f32 %v393, %v551
          %v553 = vpop.f32.mrb[0].mxu0
          %554 = vmatprep.mubr.f32.mxu0 0.0
          %555 = vmatmul.mubr.f32.gmra.mrb[0].mxu0 %v327
          %v556 = vpop.f32.mrb[0].mxu0
          %v557 = vadd.f32 %v393, %v556
          %v558 = vpop.f32.mrb[0].mxu0
          %559 = vmatprep.mubr.f32.mxu0 0.0
          %560 = vmatmul.mubr.f32.gmra.mrb[0].mxu0 %v328
          %v561 = vpop.f32.mrb[0].mxu0
          %v562 = vadd.f32 %v393, %v561
          %v563 = vpop.f32.mrb[0].mxu0
          %564 = vmatprep.mubr.f32.mxu0 0.0
          %565 = vmatmul.mubr.f32.gmra.mrb[0].mxu0 %v329
          %v566 = vpop.f32.mrb[0].mxu0
          %v567 = vadd.f32 %v393, %v566
          %v568 = vpop.f32.mrb[0].mxu0
          %569 = vmatprep.mubr.f32.mxu0 0.0
          %570 = vmatmul.mubr.f32.gmra.mrb[0].mxu0 %v330
          %v571 = vpop.f32.mrb[0].mxu0
          %v572 = vadd.f32 %v393, %v571
          %v573 = vpop.f32.mrb[0].mxu0
          %574 = vmatprep.mubr.f32.mxu0 0.0
          %575 = vmatmul.mubr.f32.gmra.mrb[0].mxu0 %v331
          %v576 = vpop.f32.mrb[0].mxu0
          %v577 = vadd.f32 %v393, %v576
          %v578 = vpop.f32.mrb[0].mxu0
          %579 = vmatprep.mubr.f32.mxu0 0.0
          %580 = vmatmul.mubr.f32.gmra.mrb[0].mxu0 %v332
          %v581 = vpop.f32.mrb[0].mxu0
          %v582 = vadd.f32 %v393, %v581
          %v583 = vpop.f32.mrb[0].mxu0
          %584 = vmatprep.mubr.f32.mxu0 0.0
          %585 = vmatmul.mubr.f32.gmra.mrb[0].mxu0 %v333
          %v586 = vpop.f32.mrb[0].mxu0
          %v587 = vadd.f32 %v393, %v586
          %v588 = vpop.f32.mrb[0].mxu0
          %589 = vmatprep.mubr.f32.mxu0 0.0
          %590 = vmatmul.mubr.f32.gmra.mrb[0].mxu0 %v334
          %v591 = vpop.f32.mrb[0].mxu0
          %v592 = vadd.f32 %v393, %v591
          %v593 = vpop.f32.mrb[0].mxu0
          %594 = vmatprep.mubr.f32.mxu0 0.0
          %595 = vmatmul.mubr.f32.gmra.mrb[0].mxu0 %v335
          %v596 = vpop.f32.mrb[0].mxu0
          %v597 = vadd.f32 %v393, %v596
          %v598 = vpop.f32.mrb[0].mxu0
          %599 = vmatprep.mubr.f32.mxu0 0.0
          %600 = vmatmul.mubr.f32.gmra.mrb[0].mxu0 %v336
          %v601 = vpop.f32.mrb[0].mxu0
          %v602 = vadd.f32 %v393, %v601
          %v603 = vpop.f32.mrb[0].mxu0
          %604 = vmatprep.mubr.f32.mxu0 0.0
          %605 = vmatmul.mubr.f32.gmra.mrb[0].mxu0 %v337
          %v606 = vpop.f32.mrb[0].mxu0
          %v607 = vadd.f32 %v393, %v606
          %v608 = vpop.f32.mrb[0].mxu0
          %609 = vmatprep.mubr.f32.mxu0 0.0
          %610 = vmatmul.mubr.f32.gmra.mrb[0].mxu0 %v338
          %v611 = vpop.f32.mrb[0].mxu0
          %v612 = vadd.f32 %v393, %v611
          %v613 = vpop.f32.mrb[0].mxu0
          %614 = vmatprep.mubr.f32.mxu0 0.0
          %615 = vmatmul.mubr.f32.gmra.mrb[0].mxu0 %v339
          %v616 = vpop.f32.mrb[0].mxu0
          %v617 = vadd.f32 %v393, %v616
          %v618 = vpop.f32.mrb[0].mxu0
          %619 = vmatprep.mubr.f32.mxu0 0.0
          %620 = vmatmul.mubr.f32.gmra.mrb[0].mxu0 %v340
          %v621 = vpop.f32.mrb[0].mxu0
          %v622 = vadd.f32 %v393, %v621
          %v623 = vpop.f32.mrb[0].mxu0
          %624 = vmatprep.mubr.f32.mxu0 0.0
          %625 = vmatmul.mubr.f32.gmra.mrb[0].mxu0 %v341
          %v626 = vpop.f32.mrb[0].mxu0
          %v627 = vadd.f32 %v393, %v626
          %v628 = vpop.f32.mrb[0].mxu0
          %629 = vmatprep.mubr.f32.mxu0 0.0
          %630 = vmatmul.mubr.f32.gmra.mrb[0].mxu0 %v342
          %v631 = vpop.f32.mrb[0].mxu0
          %v632 = vadd.f32 %v393, %v631
          %v633 = vpop.f32.mrb[0].mxu0
          %634 = vmatprep.mubr.f32.mxu0 0.0
          %635 = vmatmul.mubr.f32.gmra.mrb[0].mxu0 %v343
          %v636 = vpop.f32.mrb[0].mxu0
          %v637 = vadd.f32 %v393, %v636
          %v638 = vpop.f32.mrb[0].mxu0
          %639 = vmatprep.mubr.f32.mxu0 0.0
          %640 = vmatmul.mubr.f32.gmra.mrb[0].mxu0 %v344
          %v641 = vpop.f32.mrb[0].mxu0
          %v642 = vadd.f32 %v393, %v641
          %v643 = vpop.f32.mrb[0].mxu0
          %644 = vmatprep.mubr.f32.mxu0 0.0
          %645 = vmatmul.mubr.f32.gmra.mrb[0].mxu0 %v345
          %v646 = vpop.f32.mrb[0].mxu0
          %v647 = vadd.f32 %v393, %v646
          %v648 = vpop.f32.mrb[0].mxu0
          %649 = vmatprep.mubr.f32.mxu0 0.0
          %650 = vmatmul.mubr.f32.gmra.mrb[0].mxu0 %v346
          %v651 = vpop.f32.mrb[0].mxu0
          %v652 = vadd.f32 %v393, %v651
          %v653 = vpop.f32.mrb[0].mxu0
          %654 = vmatprep.mubr.f32.mxu0 0.0
          %655 = vmatmul.mubr.f32.gmra.mrb[0].mxu0 %v347
          %v656 = vpop.f32.mrb[0].mxu0
          %v657 = vadd.f32 %v393, %v656
          %v658 = vpop.f32.mrb[0].mxu0
          %659 = vmatprep.mubr.f32.mxu0 0.0
          %660 = vmatmul.mubr.f32.gmra.mrb[0].mxu0 %v348
          %v661 = vpop.f32.mrb[0].mxu0
          %v662 = vadd.f32 %v393, %v661
          %v663 = vpop.f32.mrb[0].mxu0
          %664 = vmatprep.mubr.f32.mxu0 0.0
          %665 = vmatmul.mubr.f32.gmra.mrb[0].mxu0 %v349
          %v666 = vpop.f32.mrb[0].mxu0
          %v667 = vadd.f32 %v393, %v666
          %v668 = vpop.f32.mrb[0].mxu0
          %669 = vmatprep.mubr.f32.mxu0 0.0
          %670 = vmatmul.mubr.f32.gmra.mrb[0].mxu0 %v350
          %v671 = vpop.f32.mrb[0].mxu0
          %v672 = vadd.f32 %v393, %v671
          %v673 = vpop.f32.mrb[0].mxu0
          %674 = vmatprep.mubr.f32.mxu0 0.0
          %675 = vmatmul.mubr.f32.gmra.mrb[0].mxu0 %v351
          %v676 = vpop.f32.mrb[0].mxu0
          %v677 = vadd.f32 %v393, %v676
          %v678 = vpop.f32.mrb[0].mxu0
          %679 = vmatprep.mubr.f32.mxu0 0.0
          %680 = vmatmul.mubr.f32.gmra.mrb[0].mxu0 %v352
          %v681 = vpop.f32.mrb[0].mxu0
          %v682 = vadd.f32 %v393, %v681
          %v683 = vpop.f32.mrb[0].mxu0
          %684 = vmatprep.mubr.f32.mxu0 0.0
          %685 = vmatmul.mubr.f32.gmra.mrb[0].mxu0 %v353
          %v686 = vpop.f32.mrb[0].mxu0
          %v687 = vadd.f32 %v393, %v686
          %v688 = vpop.f32.mrb[0].mxu0
          %689 = vmatprep.mubr.f32.mxu0 0.0
          %690 = vmatmul.mubr.f32.gmra.mrb[0].mxu0 %v354
          %v691 = vpop.f32.mrb[0].mxu0
          %v692 = vadd.f32 %v393, %v691
          %v693 = vpop.f32.mrb[0].mxu0
          %694 = vmatprep.mubr.f32.mxu0 0.0
          %695 = vmatmul.mubr.f32.gmra.mrb[0].mxu0 %v355
          %v696 = vpop.f32.mrb[0].mxu0
          %v697 = vadd.f32 %v393, %v696
          %v698 = vpop.f32.mrb[0].mxu0
          %699 = vmatprep.mubr.f32.mxu0 0.0
          %700 = vmatmul.mubr.f32.gmra.mrb[0].mxu0 %v356
          %v701 = vpop.f32.mrb[0].mxu0
          %v702 = vadd.f32 %v393, %v701
          %v703 = vpop.f32.mrb[0].mxu0
          %704 = vmatprep.mubr.f32.mxu0 0.0
          %705 = vmatmul.mubr.f32.gmra.mrb[0].mxu0 %v357
          %v706 = vpop.f32.mrb[0].mxu0
          %v707 = vadd.f32 %v393, %v706
          %v708 = vpop.f32.mrb[0].mxu0
          %709 = vmatprep.mubr.f32.mxu0 0.0
          %710 = vmatmul.mubr.f32.gmra.mrb[0].mxu0 %v358
          %v711 = vpop.f32.mrb[0].mxu0
          %v712 = vadd.f32 %v393, %v711
          %v713 = vpop.f32.mrb[0].mxu0
          %714 = vmatprep.mubr.f32.mxu0 0.0
          %715 = vmatmul.mubr.f32.gmra.mrb[0].mxu0 %v359
          %v716 = vpop.f32.mrb[0].mxu0
          %v717 = vadd.f32 %v393, %v716
          %v718 = vpop.f32.mrb[0].mxu0
          %719 = vmatprep.mubr.f32.mxu0 0.0
          %720 = vmatmul.mubr.f32.gmra.mrb[0].mxu0 %v360
          %v721 = vpop.f32.mrb[0].mxu0
          %v722 = vadd.f32 %v393, %v721
          %v723 = vpop.f32.mrb[0].mxu0
          %724 = vmatprep.mubr.f32.mxu0 0.0
          %725 = vmatmul.mubr.f32.gmra.mrb[0].mxu0 %v361
          %v726 = vpop.f32.mrb[0].mxu0
          %v727 = vadd.f32 %v393, %v726
          %v728 = vpop.f32.mrb[0].mxu0
          %729 = vmatprep.mubr.f32.mxu0 0.0
          %730 = vmatmul.mubr.f32.gmra.mrb[0].mxu0 %v362
          %v731 = vpop.f32.mrb[0].mxu0
          %v732 = vadd.f32 %v393, %v731
          %v733 = vpop.f32.mrb[0].mxu0
          %734 = vmatprep.mubr.f32.mxu0 0.0
          %735 = vmatmul.mubr.f32.gmra.mrb[0].mxu0 %v363
          %v736 = vpop.f32.mrb[0].mxu0
          %v737 = vadd.f32 %v393, %v736
          %v738 = vpop.f32.mrb[0].mxu0
          %739 = vmatprep.mubr.f32.mxu0 0.0
          %740 = vmatmul.mubr.f32.gmra.mrb[0].mxu0 %v364
          %v741 = vpop.f32.mrb[0].mxu0
          %v742 = vadd.f32 %v393, %v741
          %v743 = vpop.f32.mrb[0].mxu0
          %744 = vmatprep.mubr.f32.mxu0 0.0
          %745 = vmatmul.mubr.f32.gmra.mrb[0].mxu0 %v365
          %v746 = vpop.f32.mrb[0].mxu0
          %v747 = vadd.f32 %v393, %v746
          %v748 = vpop.f32.mrb[0].mxu0
          %749 = vmatprep.mubr.f32.mxu0 0.0
          %750 = vmatmul.mubr.f32.gmra.mrb[0].mxu0 %v366
          %v751 = vpop.f32.mrb[0].mxu0
          %v752 = vadd.f32 %v393, %v751
          %v753 = vpop.f32.mrb[0].mxu0
          %754 = vmatprep.mubr.f32.mxu0 0.0
          %755 = vmatmul.mubr.f32.gmra.mrb[0].mxu0 %v367
          %v756 = vpop.f32.mrb[0].mxu0
          %v757 = vadd.f32 %v393, %v756
          %v758 = vpop.f32.mrb[0].mxu0
          %759 = vmatprep.mubr.f32.mxu0 0.0
          %760 = vmatmul.mubr.f32.gmra.mrb[0].mxu0 %v368
          %v761 = vpop.f32.mrb[0].mxu0
          %v762 = vadd.f32 %v393, %v761
          %v763 = vpop.f32.mrb[0].mxu0
          %764 = vmatprep.mubr.f32.mxu0 0.0
          %765 = vmatmul.mubr.f32.gmra.mrb[0].mxu0 %v369
          %v766 = vpop.f32.mrb[0].mxu0
          %v767 = vadd.f32 %v393, %v766
          %v768 = vpop.f32.mrb[0].mxu0
          %769 = vmatprep.mubr.f32.mxu0 0.0
          %770 = vmatmul.mubr.f32.gmra.mrb[0].mxu0 %v370
          %v771 = vpop.f32.mrb[0].mxu0
          %v772 = vadd.f32 %v393, %v771
          %v773 = vpop.f32.mrb[0].mxu0
          %774 = vmatprep.mubr.f32.mxu0 0.0
          %775 = vmatmul.mubr.f32.gmra.mrb[0].mxu0 %v371
          %v776 = vpop.f32.mrb[0].mxu0
          %v777 = vadd.f32 %v393, %v776
          %v778 = vpop.f32.mrb[0].mxu0
          %779 = vdwg.mxu0
          %780 = vst [vmem:[#allocation2] sm:$0xff] %v462
          %781 = vst [vmem:[#allocation2 + $0x8] sm:$0xff] %v467
          %782 = vst [vmem:[#allocation2 + $0x10] sm:$0xff] %v472
          %783 = vst [vmem:[#allocation2 + $0x18] sm:$0xff] %v477
          %784 = vst [vmem:[#allocation2 + $0x20] sm:$0xff] %v482
          %785 = vst [vmem:[#allocation2 + $0x28] sm:$0xff] %v487
          %786 = vst [vmem:[#allocation2 + $0x30] sm:$0xff] %v492
          %787 = vst [vmem:[#allocation2 + $0x38] sm:$0xff] %v497
          %788 = vst [vmem:[#allocation2 + $0x40] sm:$0xff] %v502
          %789 = vst [vmem:[#allocation2 + $0x48] sm:$0xff] %v507
          %790 = vst [vmem:[#allocation2 + $0x50] sm:$0xff] %v512
          %791 = vst [vmem:[#allocation2 + $0x58] sm:$0xff] %v517
          %792 = vst [vmem:[#allocation2 + $0x60] sm:$0xff] %v522
          %793 = vst [vmem:[#allocation2 + $0x68] sm:$0xff] %v527
          %794 = vst [vmem:[#allocation2 + $0x70] sm:$0xff] %v532
          %795 = vst [vmem:[#allocation2 + $0x78] sm:$0xff] %v537
          %796 = vst [vmem:[#allocation2 + $0x80] sm:$0xff] %v542
          %797 = vst [vmem:[#allocation2 + $0x88] sm:$0xff] %v547
          %798 = vst [vmem:[#allocation2 + $0x90] sm:$0xff] %v552
          %799 = vst [vmem:[#allocation2 + $0x98] sm:$0xff] %v557
          %800 = vst [vmem:[#allocation2 + $0xa0] sm:$0xff] %v562
          %801 = vst [vmem:[#allocation2 + $0xa8] sm:$0xff] %v567
          %802 = vst [vmem:[#allocation2 + $0xb0] sm:$0xff] %v572
          %803 = vst [vmem:[#allocation2 + $0xb8] sm:$0xff] %v577
          %804 = vst [vmem:[#allocation2 + $0xc0] sm:$0xff] %v582
          %805 = vst [vmem:[#allocation2 + $0xc8] sm:$0xff] %v587
          %806 = vst [vmem:[#allocation2 + $0xd0] sm:$0xff] %v592
          %807 = vst [vmem:[#allocation2 + $0xd8] sm:$0xff] %v597
          %808 = vst [vmem:[#allocation2 + $0xe0] sm:$0xff] %v602
          %809 = vst [vmem:[#allocation2 + $0xe8] sm:$0xff] %v607
          %810 = vst [vmem:[#allocation2 + $0xf0] sm:$0xff] %v612
          %811 = vst [vmem:[#allocation2 + $0xf8] sm:$0xff] %v617
          %812 = vst [vmem:[#allocation2 + $0x100] sm:$0xff] %v622
          %813 = vst [vmem:[#allocation2 + $0x108] sm:$0xff] %v627
          %814 = vst [vmem:[#allocation2 + $0x110] sm:$0xff] %v632
          %815 = vst [vmem:[#allocation2 + $0x118] sm:$0xff] %v637
          %816 = vst [vmem:[#allocation2 + $0x120] sm:$0xff] %v642
          %817 = vst [vmem:[#allocation2 + $0x128] sm:$0xff] %v647
          %818 = vst [vmem:[#allocation2 + $0x130] sm:$0xff] %v652
          %819 = vst [vmem:[#allocation2 + $0x138] sm:$0xff] %v657
          %820 = vst [vmem:[#allocation2 + $0x140] sm:$0xff] %v662
          %821 = vst [vmem:[#allocation2 + $0x148] sm:$0xff] %v667
          %822 = vst [vmem:[#allocation2 + $0x150] sm:$0xff] %v672
          %823 = vst [vmem:[#allocation2 + $0x158] sm:$0xff] %v677
          %824 = vst [vmem:[#allocation2 + $0x160] sm:$0xff] %v682
          %825 = vst [vmem:[#allocation2 + $0x168] sm:$0xff] %v687
          %826 = vst [vmem:[#allocation2 + $0x170] sm:$0xff] %v692
          %827 = vst [vmem:[#allocation2 + $0x178] sm:$0xff] %v697
          %828 = vst [vmem:[#allocation2 + $0x180] sm:$0xff] %v702
          %829 = vst [vmem:[#allocation2 + $0x188] sm:$0xff] %v707
          %830 = vst [vmem:[#allocation2 + $0x190] sm:$0xff] %v712
          %831 = vst [vmem:[#allocation2 + $0x198] sm:$0xff] %v717
          %832 = vst [vmem:[#allocation2 + $0x1a0] sm:$0xff] %v722
          %833 = vst [vmem:[#allocation2 + $0x1a8] sm:$0xff] %v727
          %834 = vst [vmem:[#allocation2 + $0x1b0] sm:$0xff] %v732
          %835 = vst [vmem:[#allocation2 + $0x1b8] sm:$0xff] %v737
          %836 = vst [vmem:[#allocation2 + $0x1c0] sm:$0xff] %v742
          %837 = vst [vmem:[#allocation2 + $0x1c8] sm:$0xff] %v747
          %838 = vst [vmem:[#allocation2 + $0x1d0] sm:$0xff] %v752
          %839 = vst [vmem:[#allocation2 + $0x1d8] sm:$0xff] %v757
          %840 = vst [vmem:[#allocation2 + $0x1e0] sm:$0xff] %v762
          %841 = vst [vmem:[#allocation2 + $0x1e8] sm:$0xff] %v767
          %842 = vst [vmem:[#allocation2 + $0x1f0] sm:$0xff] %v772
          %843 = vst [vmem:[#allocation2 + $0x1f8] sm:$0xff] %v777
        $region56: #{tpu_custom_call.1} parent=35 // pred_fallthru
          _
        %v844 = vld [vmem:[%s264] sm:$0xff]
        %v845 = vld [vmem:[%s264 + $0x8] sm:$0xff]
        %v846 = vld [vmem:[%s264 + $0x10] sm:$0xff]
        %v847 = vld [vmem:[%s264 + $0x18] sm:$0xff]
        %v848 = vld [vmem:[%s264 + $0x20] sm:$0xff]
        %v849 = vld [vmem:[%s264 + $0x28] sm:$0xff]
        %v850 = vld [vmem:[%s264 + $0x30] sm:$0xff]
        %v851 = vld [vmem:[%s264 + $0x38] sm:$0xff]
        %v852 = vld [vmem:[%s264 + $0x40] sm:$0xff]
        %v853 = vld [vmem:[%s264 + $0x48] sm:$0xff]
        %v854 = vld [vmem:[%s264 + $0x50] sm:$0xff]
        %v855 = vld [vmem:[%s264 + $0x58] sm:$0xff]
        %v856 = vld [vmem:[%s264 + $0x60] sm:$0xff]
        %v857 = vld [vmem:[%s264 + $0x68] sm:$0xff]
        %v858 = vld [vmem:[%s264 + $0x70] sm:$0xff]
        %v859 = vld [vmem:[%s264 + $0x78] sm:$0xff]
        %v860 = vld [vmem:[%s264 + $0x80] sm:$0xff]
        %v861 = vld [vmem:[%s264 + $0x88] sm:$0xff]
        %v862 = vld [vmem:[%s264 + $0x90] sm:$0xff]
        %v863 = vld [vmem:[%s264 + $0x98] sm:$0xff]
        %v864 = vld [vmem:[%s264 + $0xa0] sm:$0xff]
        %v865 = vld [vmem:[%s264 + $0xa8] sm:$0xff]
        %v866 = vld [vmem:[%s264 + $0xb0] sm:$0xff]
        %v867 = vld [vmem:[%s264 + $0xb8] sm:$0xff]
        %v868 = vld [vmem:[%s264 + $0xc0] sm:$0xff]
        %v869 = vld [vmem:[%s264 + $0xc8] sm:$0xff]
        %v870 = vld [vmem:[%s264 + $0xd0] sm:$0xff]
        %v871 = vld [vmem:[%s264 + $0xd8] sm:$0xff]
        %v872 = vld [vmem:[%s264 + $0xe0] sm:$0xff]
        %v873 = vld [vmem:[%s264 + $0xe8] sm:$0xff]
        %v874 = vld [vmem:[%s264 + $0xf0] sm:$0xff]
        %v875 = vld [vmem:[%s264 + $0xf8] sm:$0xff]
        %v876 = vld [vmem:[%s264 + $0x100] sm:$0xff]
        %v877 = vld [vmem:[%s264 + $0x108] sm:$0xff]
        %v878 = vld [vmem:[%s264 + $0x110] sm:$0xff]
        %v879 = vld [vmem:[%s264 + $0x118] sm:$0xff]
        %v880 = vld [vmem:[%s264 + $0x120] sm:$0xff]
        %v881 = vld [vmem:[%s264 + $0x128] sm:$0xff]
        %v882 = vld [vmem:[%s264 + $0x130] sm:$0xff]
        %v883 = vld [vmem:[%s264 + $0x138] sm:$0xff]
        %v884 = vld [vmem:[%s264 + $0x140] sm:$0xff]
        %v885 = vld [vmem:[%s264 + $0x148] sm:$0xff]
        %v886 = vld [vmem:[%s264 + $0x150] sm:$0xff]
        %v887 = vld [vmem:[%s264 + $0x158] sm:$0xff]
        %v888 = vld [vmem:[%s264 + $0x160] sm:$0xff]
        %v889 = vld [vmem:[%s264 + $0x168] sm:$0xff]
        %v890 = vld [vmem:[%s264 + $0x170] sm:$0xff]
        %v891 = vld [vmem:[%s264 + $0x178] sm:$0xff]
        %v892 = vld [vmem:[%s264 + $0x180] sm:$0xff]
        %v893 = vld [vmem:[%s264 + $0x188] sm:$0xff]
        %v894 = vld [vmem:[%s264 + $0x190] sm:$0xff]
        %v895 = vld [vmem:[%s264 + $0x198] sm:$0xff]
        %v896 = vld [vmem:[%s264 + $0x1a0] sm:$0xff]
        %v897 = vld [vmem:[%s264 + $0x1a8] sm:$0xff]
        %v898 = vld [vmem:[%s264 + $0x1b0] sm:$0xff]
        %v899 = vld [vmem:[%s264 + $0x1b8] sm:$0xff]
        %v900 = vld [vmem:[%s264 + $0x1c0] sm:$0xff]
        %v901 = vld [vmem:[%s264 + $0x1c8] sm:$0xff]
        %v902 = vld [vmem:[%s264 + $0x1d0] sm:$0xff]
        %v903 = vld [vmem:[%s264 + $0x1d8] sm:$0xff]
        %v904 = vld [vmem:[%s264 + $0x1e0] sm:$0xff]
        %v905 = vld [vmem:[%s264 + $0x1e8] sm:$0xff]
        %v906 = vld [vmem:[%s264 + $0x1f0] sm:$0xff]
        %v907 = vld [vmem:[%s264 + $0x1f8] sm:$0xff]
        %v908 = vld [vmem:[%s264 + $0x200] sm:$0xff]
        %v909 = vld [vmem:[%s264 + $0x208] sm:$0xff]
        %v910 = vld [vmem:[%s264 + $0x210] sm:$0xff]
        %v911 = vld [vmem:[%s264 + $0x218] sm:$0xff]
        %v912 = vld [vmem:[%s264 + $0x220] sm:$0xff]
        %v913 = vld [vmem:[%s264 + $0x228] sm:$0xff]
        %v914 = vld [vmem:[%s264 + $0x230] sm:$0xff]
        %v915 = vld [vmem:[%s264 + $0x238] sm:$0xff]
        %v916 = vld [vmem:[%s264 + $0x240] sm:$0xff]
        %v917 = vld [vmem:[%s264 + $0x248] sm:$0xff]
        %v918 = vld [vmem:[%s264 + $0x250] sm:$0xff]
        %v919 = vld [vmem:[%s264 + $0x258] sm:$0xff]
        %v920 = vld [vmem:[%s264 + $0x260] sm:$0xff]
        %v921 = vld [vmem:[%s264 + $0x268] sm:$0xff]
        %v922 = vld [vmem:[%s264 + $0x270] sm:$0xff]
        %v923 = vld [vmem:[%s264 + $0x278] sm:$0xff]
        %v924 = vld [vmem:[%s264 + $0x280] sm:$0xff]
        %v925 = vld [vmem:[%s264 + $0x288] sm:$0xff]
        %v926 = vld [vmem:[%s264 + $0x290] sm:$0xff]
        %v927 = vld [vmem:[%s264 + $0x298] sm:$0xff]
        %v928 = vld [vmem:[%s264 + $0x2a0] sm:$0xff]
        %v929 = vld [vmem:[%s264 + $0x2a8] sm:$0xff]
        %v930 = vld [vmem:[%s264 + $0x2b0] sm:$0xff]
        %v931 = vld [vmem:[%s264 + $0x2b8] sm:$0xff]
        %v932 = vld [vmem:[%s264 + $0x2c0] sm:$0xff]
        %v933 = vld [vmem:[%s264 + $0x2c8] sm:$0xff]
        %v934 = vld [vmem:[%s264 + $0x2d0] sm:$0xff]
        %v935 = vld [vmem:[%s264 + $0x2d8] sm:$0xff]
        %v936 = vld [vmem:[%s264 + $0x2e0] sm:$0xff]
        %v937 = vld [vmem:[%s264 + $0x2e8] sm:$0xff]
        %v938 = vld [vmem:[%s264 + $0x2f0] sm:$0xff]
        %v939 = vld [vmem:[%s264 + $0x2f8] sm:$0xff]
        %v940 = vld [vmem:[%s264 + $0x300] sm:$0xff]
        %v941 = vld [vmem:[%s264 + $0x308] sm:$0xff]
        %v942 = vld [vmem:[%s264 + $0x310] sm:$0xff]
        %v943 = vld [vmem:[%s264 + $0x318] sm:$0xff]
        %v944 = vld [vmem:[%s264 + $0x320] sm:$0xff]
        %v945 = vld [vmem:[%s264 + $0x328] sm:$0xff]
        %v946 = vld [vmem:[%s264 + $0x330] sm:$0xff]
        %v947 = vld [vmem:[%s264 + $0x338] sm:$0xff]
        %v948 = vld [vmem:[%s264 + $0x340] sm:$0xff]
        %v949 = vld [vmem:[%s264 + $0x348] sm:$0xff]
        %v950 = vld [vmem:[%s264 + $0x350] sm:$0xff]
        %v951 = vld [vmem:[%s264 + $0x358] sm:$0xff]
        %v952 = vld [vmem:[%s264 + $0x360] sm:$0xff]
        %v953 = vld [vmem:[%s264 + $0x368] sm:$0xff]
        %v954 = vld [vmem:[%s264 + $0x370] sm:$0xff]
        %v955 = vld [vmem:[%s264 + $0x378] sm:$0xff]
        %v956 = vld [vmem:[%s264 + $0x380] sm:$0xff]
        %v957 = vld [vmem:[%s264 + $0x388] sm:$0xff]
        %v958 = vld [vmem:[%s264 + $0x390] sm:$0xff]
        %v959 = vld [vmem:[%s264 + $0x398] sm:$0xff]
        %v960 = vld [vmem:[%s264 + $0x3a0] sm:$0xff]
        %v961 = vld [vmem:[%s264 + $0x3a8] sm:$0xff]
        %v962 = vld [vmem:[%s264 + $0x3b0] sm:$0xff]
        %v963 = vld [vmem:[%s264 + $0x3b8] sm:$0xff]
        %v964 = vld [vmem:[%s264 + $0x3c0] sm:$0xff]
        %v965 = vld [vmem:[%s264 + $0x3c8] sm:$0xff]
        %v966 = vld [vmem:[%s264 + $0x3d0] sm:$0xff]
        %v967 = vld [vmem:[%s264 + $0x3d8] sm:$0xff]
        %v968 = vld [vmem:[%s264 + $0x3e0] sm:$0xff]
        %v969 = vld [vmem:[%s264 + $0x3e8] sm:$0xff]
        %v970 = vld [vmem:[%s264 + $0x3f0] sm:$0xff]
        %v971 = vld [vmem:[%s264 + $0x3f8] sm:$0xff]
        %v972 = vld [vmem:[#allocation2] sm:$0xff]
        %v973 = vld [vmem:[#allocation2 + $0x8] sm:$0xff]
        %v974 = vld [vmem:[#allocation2 + $0x10] sm:$0xff]
        %v975 = vld [vmem:[#allocation2 + $0x18] sm:$0xff]
        %v976 = vld [vmem:[#allocation2 + $0x20] sm:$0xff]
        %v977 = vld [vmem:[#allocation2 + $0x28] sm:$0xff]
        %v978 = vld [vmem:[#allocation2 + $0x30] sm:$0xff]
        %v979 = vld [vmem:[#allocation2 + $0x38] sm:$0xff]
        %v980 = vld [vmem:[#allocation2 + $0x40] sm:$0xff]
        %v981 = vld [vmem:[#allocation2 + $0x48] sm:$0xff]
        %v982 = vld [vmem:[#allocation2 + $0x50] sm:$0xff]
        %v983 = vld [vmem:[#allocation2 + $0x58] sm:$0xff]
        %v984 = vld [vmem:[#allocation2 + $0x60] sm:$0xff]
        %v985 = vld [vmem:[#allocation2 + $0x68] sm:$0xff]
        %v986 = vld [vmem:[#allocation2 + $0x70] sm:$0xff]
        %v987 = vld [vmem:[#allocation2 + $0x78] sm:$0xff]
        %v988 = vld [vmem:[#allocation2 + $0x80] sm:$0xff]
        %v989 = vld [vmem:[#allocation2 + $0x88] sm:$0xff]
        %v990 = vld [vmem:[#allocation2 + $0x90] sm:$0xff]
        %v991 = vld [vmem:[#allocation2 + $0x98] sm:$0xff]
        %v992 = vld [vmem:[#allocation2 + $0xa0] sm:$0xff]
        %v993 = vld [vmem:[#allocation2 + $0xa8] sm:$0xff]
        %v994 = vld [vmem:[#allocation2 + $0xb0] sm:$0xff]
        %v995 = vld [vmem:[#allocation2 + $0xb8] sm:$0xff]
        %v996 = vld [vmem:[#allocation2 + $0xc0] sm:$0xff]
        %v997 = vld [vmem:[#allocation2 + $0xc8] sm:$0xff]
        %v998 = vld [vmem:[#allocation2 + $0xd0] sm:$0xff]
        %v999 = vld [vmem:[#allocation2 + $0xd8] sm:$0xff]
        %v1000 = vld [vmem:[#allocation2 + $0xe0] sm:$0xff]
        %v1001 = vld [vmem:[#allocation2 + $0xe8] sm:$0xff]
        %v1002 = vld [vmem:[#allocation2 + $0xf0] sm:$0xff]
        %v1003 = vld [vmem:[#allocation2 + $0xf8] sm:$0xff]
        %v1004 = vld [vmem:[#allocation2 + $0x100] sm:$0xff]
        %v1005 = vld [vmem:[#allocation2 + $0x108] sm:$0xff]
        %v1006 = vld [vmem:[#allocation2 + $0x110] sm:$0xff]
        %v1007 = vld [vmem:[#allocation2 + $0x118] sm:$0xff]
        %v1008 = vld [vmem:[#allocation2 + $0x120] sm:$0xff]
        %v1009 = vld [vmem:[#allocation2 + $0x128] sm:$0xff]
        %v1010 = vld [vmem:[#allocation2 + $0x130] sm:$0xff]
        %v1011 = vld [vmem:[#allocation2 + $0x138] sm:$0xff]
        %v1012 = vld [vmem:[#allocation2 + $0x140] sm:$0xff]
        %v1013 = vld [vmem:[#allocation2 + $0x148] sm:$0xff]
        %v1014 = vld [vmem:[#allocation2 + $0x150] sm:$0xff]
        %v1015 = vld [vmem:[#allocation2 + $0x158] sm:$0xff]
        %v1016 = vld [vmem:[#allocation2 + $0x160] sm:$0xff]
        %v1017 = vld [vmem:[#allocation2 + $0x168] sm:$0xff]
        %v1018 = vld [vmem:[#allocation2 + $0x170] sm:$0xff]
        %v1019 = vld [vmem:[#allocation2 + $0x178] sm:$0xff]
        %v1020 = vld [vmem:[#allocation2 + $0x180] sm:$0xff]
        %v1021 = vld [vmem:[#allocation2 + $0x188] sm:$0xff]
        %v1022 = vld [vmem:[#allocation2 + $0x190] sm:$0xff]
        %v1023 = vld [vmem:[#allocation2 + $0x198] sm:$0xff]
        %v1024 = vld [vmem:[#allocation2 + $0x1a0] sm:$0xff]
        %v1025 = vld [vmem:[#allocation2 + $0x1a8] sm:$0xff]
        %v1026 = vld [vmem:[#allocation2 + $0x1b0] sm:$0xff]
        %v1027 = vld [vmem:[#allocation2 + $0x1b8] sm:$0xff]
        %v1028 = vld [vmem:[#allocation2 + $0x1c0] sm:$0xff]
        %v1029 = vld [vmem:[#allocation2 + $0x1c8] sm:$0xff]
        %v1030 = vld [vmem:[#allocation2 + $0x1d0] sm:$0xff]
        %v1031 = vld [vmem:[#allocation2 + $0x1d8] sm:$0xff]
        %v1032 = vld [vmem:[#allocation2 + $0x1e0] sm:$0xff]
        %v1033 = vld [vmem:[#allocation2 + $0x1e8] sm:$0xff]
        %v1034 = vld [vmem:[#allocation2 + $0x1f0] sm:$0xff]
        %v1035 = vld [vmem:[#allocation2 + $0x1f8] sm:$0xff]
        %1036 = vmatprep.subr.mxu0 0.0
        %1037 = vmatpush1.msra.mxu0 %v972
        %1038 = vmatprep.subr.mxu0 0.0
        %1039 = vmatpush1.msra.mxu0 %v973
        %1040 = vmatprep.subr.mxu0 0.0
        %1041 = vmatpush1.msra.mxu0 %v974
        %1042 = vmatprep.subr.mxu0 0.0
        %1043 = vmatpush1.msra.mxu0 %v975
        %1044 = vmatprep.subr.mxu0 0.0
        %1045 = vmatpush1.msra.mxu0 %v976
        %1046 = vmatprep.subr.mxu0 0.0
        %1047 = vmatpush1.msra.mxu0 %v977
        %1048 = vmatprep.subr.mxu0 0.0
        %1049 = vmatpush1.msra.mxu0 %v978
        %1050 = vmatprep.subr.mxu0 0.0
        %1051 = vmatpush1.msra.mxu0 %v979
        %1052 = vmatprep.subr.mxu0 0.0
        %1053 = vmatpush1.msra.mxu0 %v980
        %1054 = vmatprep.subr.mxu0 0.0
        %1055 = vmatpush1.msra.mxu0 %v981
        %1056 = vmatprep.subr.mxu0 0.0
        %1057 = vmatpush1.msra.mxu0 %v982
        %1058 = vmatprep.subr.mxu0 0.0
        %1059 = vmatpush1.msra.mxu0 %v983
        %1060 = vmatprep.subr.mxu0 0.0
        %1061 = vmatpush1.msra.mxu0 %v984
        %1062 = vmatprep.subr.mxu0 0.0
        %1063 = vmatpush1.msra.mxu0 %v985
        %1064 = vmatprep.subr.mxu0 0.0
        %1065 = vmatpush1.msra.mxu0 %v986
        %1066 = vmatprep.subr.mxu0 0.0
        %1067 = vmatpush1.msra.mxu0 %v987
        %1068 = vmatprep.subr.mxu0 0.0
        %1069 = vmatpush1.msra.mxu0 %v988
        %1070 = vmatprep.subr.mxu0 0.0
        %1071 = vmatpush1.msra.mxu0 %v989
        %1072 = vmatprep.subr.mxu0 0.0
        %1073 = vmatpush1.msra.mxu0 %v990
        %1074 = vmatprep.subr.mxu0 0.0
        %1075 = vmatpush1.msra.mxu0 %v991
        %1076 = vmatprep.subr.mxu0 0.0
        %1077 = vmatpush1.msra.mxu0 %v992
        %1078 = vmatprep.subr.mxu0 0.0
        %1079 = vmatpush1.msra.mxu0 %v993
        %1080 = vmatprep.subr.mxu0 0.0
        %1081 = vmatpush1.msra.mxu0 %v994
        %1082 = vmatprep.subr.mxu0 0.0
        %1083 = vmatpush1.msra.mxu0 %v995
        %1084 = vmatprep.subr.mxu0 0.0
        %1085 = vmatpush1.msra.mxu0 %v996
        %1086 = vmatprep.subr.mxu0 0.0
        %1087 = vmatpush1.msra.mxu0 %v997
        %1088 = vmatprep.subr.mxu0 0.0
        %1089 = vmatpush1.msra.mxu0 %v998
        %1090 = vmatprep.subr.mxu0 0.0
        %1091 = vmatpush1.msra.mxu0 %v999
        %1092 = vmatprep.subr.mxu0 0.0
        %1093 = vmatpush1.msra.mxu0 %v1000
        %1094 = vmatprep.subr.mxu0 0.0
        %1095 = vmatpush1.msra.mxu0 %v1001
        %1096 = vmatprep.subr.mxu0 0.0
        %1097 = vmatpush1.msra.mxu0 %v1002
        %1098 = vmatprep.subr.mxu0 0.0
        %1099 = vmatpush1.msra.mxu0 %v1003
        %1100 = vmatprep.mubr.f32.mxu0 %v845
        %1101 = vmatmul.mubr.f32.gmra.mrb[0].mxu0 %v844
        %v1102 = vpop.f32.mrb[0].mxu0
        %v1103 = vadd.f32 0.0, %v1102
        %v1104 = vpop.f32.mrb[0].mxu0
        %1105 = vmatprep.mubr.f32.mxu0 %v849
        %1106 = vmatmul.mubr.f32.gmra.mrb[0].mxu0 %v848
        %v1107 = vpop.f32.mrb[0].mxu0
        %v1108 = vadd.f32 0.0, %v1107
        %v1109 = vpop.f32.mrb[0].mxu0
        %1110 = vmatprep.mubr.f32.mxu0 %v853
        %1111 = vmatmul.mubr.f32.gmra.mrb[0].mxu0 %v852
        %v1112 = vpop.f32.mrb[0].mxu0
        %v1113 = vadd.f32 0.0, %v1112
        %v1114 = vpop.f32.mrb[0].mxu0
        %1115 = vmatprep.mubr.f32.mxu0 %v857
        %1116 = vmatmul.mubr.f32.gmra.mrb[0].mxu0 %v856
        %v1117 = vpop.f32.mrb[0].mxu0
        %v1118 = vadd.f32 0.0, %v1117
        %v1119 = vpop.f32.mrb[0].mxu0
        %1120 = vmatprep.mubr.f32.mxu0 %v861
        %1121 = vmatmul.mubr.f32.gmra.mrb[0].mxu0 %v860
        %v1122 = vpop.f32.mrb[0].mxu0
        %v1123 = vadd.f32 0.0, %v1122
        %v1124 = vpop.f32.mrb[0].mxu0
        %1125 = vmatprep.mubr.f32.mxu0 %v865
        %1126 = vmatmul.mubr.f32.gmra.mrb[0].mxu0 %v864
        %v1127 = vpop.f32.mrb[0].mxu0
        %v1128 = vadd.f32 0.0, %v1127
        %v1129 = vpop.f32.mrb[0].mxu0
        %1130 = vmatprep.mubr.f32.mxu0 %v869
        %1131 = vmatmul.mubr.f32.gmra.mrb[0].mxu0 %v868
        %v1132 = vpop.f32.mrb[0].mxu0
        %v1133 = vadd.f32 0.0, %v1132
        %v1134 = vpop.f32.mrb[0].mxu0
        %1135 = vmatprep.mubr.f32.mxu0 %v873
        %1136 = vmatmul.mubr.f32.gmra.mrb[0].mxu0 %v872
        %v1137 = vpop.f32.mrb[0].mxu0
        %v1138 = vadd.f32 0.0, %v1137
        %v1139 = vpop.f32.mrb[0].mxu0
        %1140 = vmatprep.mubr.f32.mxu0 %v877
        %1141 = vmatmul.mubr.f32.gmra.mrb[0].mxu0 %v876
        %v1142 = vpop.f32.mrb[0].mxu0
        %v1143 = vadd.f32 0.0, %v1142
        %v1144 = vpop.f32.mrb[0].mxu0
        %1145 = vmatprep.mubr.f32.mxu0 %v881
        %1146 = vmatmul.mubr.f32.gmra.mrb[0].mxu0 %v880
        %v1147 = vpop.f32.mrb[0].mxu0
        %v1148 = vadd.f32 0.0, %v1147
        %v1149 = vpop.f32.mrb[0].mxu0
        %1150 = vmatprep.mubr.f32.mxu0 %v885
        %1151 = vmatmul.mubr.f32.gmra.mrb[0].mxu0 %v884
        %v1152 = vpop.f32.mrb[0].mxu0
        %v1153 = vadd.f32 0.0, %v1152
        %v1154 = vpop.f32.mrb[0].mxu0
        %1155 = vmatprep.mubr.f32.mxu0 %v889
        %1156 = vmatmul.mubr.f32.gmra.mrb[0].mxu0 %v888
        %v1157 = vpop.f32.mrb[0].mxu0
        %v1158 = vadd.f32 0.0, %v1157
        %v1159 = vpop.f32.mrb[0].mxu0
        %1160 = vmatprep.mubr.f32.mxu0 %v893
        %1161 = vmatmul.mubr.f32.gmra.mrb[0].mxu0 %v892
        %v1162 = vpop.f32.mrb[0].mxu0
        %v1163 = vadd.f32 0.0, %v1162
        %v1164 = vpop.f32.mrb[0].mxu0
        %1165 = vmatprep.mubr.f32.mxu0 %v897
        %1166 = vmatmul.mubr.f32.gmra.mrb[0].mxu0 %v896
        %v1167 = vpop.f32.mrb[0].mxu0
        %v1168 = vadd.f32 0.0, %v1167
        %v1169 = vpop.f32.mrb[0].mxu0
        %1170 = vmatprep.mubr.f32.mxu0 %v901
        %1171 = vmatmul.mubr.f32.gmra.mrb[0].mxu0 %v900
        %v1172 = vpop.f32.mrb[0].mxu0
        %v1173 = vadd.f32 0.0, %v1172
        %v1174 = vpop.f32.mrb[0].mxu0
        %1175 = vmatprep.mubr.f32.mxu0 %v905
        %1176 = vmatmul.mubr.f32.gmra.mrb[0].mxu0 %v904
        %v1177 = vpop.f32.mrb[0].mxu0
        %v1178 = vadd.f32 0.0, %v1177
        %v1179 = vpop.f32.mrb[0].mxu0
        %1180 = vmatprep.mubr.f32.mxu0 %v909
        %1181 = vmatmul.mubr.f32.gmra.mrb[0].mxu0 %v908
        %v1182 = vpop.f32.mrb[0].mxu0
        %v1183 = vadd.f32 0.0, %v1182
        %v1184 = vpop.f32.mrb[0].mxu0
        %1185 = vmatprep.mubr.f32.mxu0 %v913
        %1186 = vmatmul.mubr.f32.gmra.mrb[0].mxu0 %v912
        %v1187 = vpop.f32.mrb[0].mxu0
        %v1188 = vadd.f32 0.0, %v1187
        %v1189 = vpop.f32.mrb[0].mxu0
        %1190 = vmatprep.mubr.f32.mxu0 %v917
        %1191 = vmatmul.mubr.f32.gmra.mrb[0].mxu0 %v916
        %v1192 = vpop.f32.mrb[0].mxu0
        %v1193 = vadd.f32 0.0, %v1192
        %v1194 = vpop.f32.mrb[0].mxu0
        %1195 = vmatprep.mubr.f32.mxu0 %v921
        %1196 = vmatmul.mubr.f32.gmra.mrb[0].mxu0 %v920
        %v1197 = vpop.f32.mrb[0].mxu0
        %v1198 = vadd.f32 0.0, %v1197
        %v1199 = vpop.f32.mrb[0].mxu0
        %1200 = vmatprep.mubr.f32.mxu0 %v925
        %1201 = vmatmul.mubr.f32.gmra.mrb[0].mxu0 %v924
        %v1202 = vpop.f32.mrb[0].mxu0
        %v1203 = vadd.f32 0.0, %v1202
        %v1204 = vpop.f32.mrb[0].mxu0
        %1205 = vmatprep.mubr.f32.mxu0 %v929
        %1206 = vmatmul.mubr.f32.gmra.mrb[0].mxu0 %v928
        %v1207 = vpop.f32.mrb[0].mxu0
        %v1208 = vadd.f32 0.0, %v1207
        %v1209 = vpop.f32.mrb[0].mxu0
        %1210 = vmatprep.mubr.f32.mxu0 %v933
        %1211 = vmatmul.mubr.f32.gmra.mrb[0].mxu0 %v932
        %v1212 = vpop.f32.mrb[0].mxu0
        %v1213 = vadd.f32 0.0, %v1212
        %v1214 = vpop.f32.mrb[0].mxu0
        %1215 = vmatprep.mubr.f32.mxu0 %v937
        %1216 = vmatmul.mubr.f32.gmra.mrb[0].mxu0 %v936
        %v1217 = vpop.f32.mrb[0].mxu0
        %v1218 = vadd.f32 0.0, %v1217
        %v1219 = vpop.f32.mrb[0].mxu0
        %1220 = vmatprep.mubr.f32.mxu0 %v941
        %1221 = vmatmul.mubr.f32.gmra.mrb[0].mxu0 %v940
        %v1222 = vpop.f32.mrb[0].mxu0
        %v1223 = vadd.f32 0.0, %v1222
        %v1224 = vpop.f32.mrb[0].mxu0
        %1225 = vmatprep.mubr.f32.mxu0 %v945
        %1226 = vmatmul.mubr.f32.gmra.mrb[0].mxu0 %v944
        %v1227 = vpop.f32.mrb[0].mxu0
        %v1228 = vadd.f32 0.0, %v1227
        %v1229 = vpop.f32.mrb[0].mxu0
        %1230 = vmatprep.mubr.f32.mxu0 %v949
        %1231 = vmatmul.mubr.f32.gmra.mrb[0].mxu0 %v948
        %v1232 = vpop.f32.mrb[0].mxu0
        %v1233 = vadd.f32 0.0, %v1232
        %v1234 = vpop.f32.mrb[0].mxu0
        %1235 = vmatprep.mubr.f32.mxu0 %v953
        %1236 = vmatmul.mubr.f32.gmra.mrb[0].mxu0 %v952
        %v1237 = vpop.f32.mrb[0].mxu0
        %v1238 = vadd.f32 0.0, %v1237
        %v1239 = vpop.f32.mrb[0].mxu0
        %1240 = vmatprep.mubr.f32.mxu0 %v957
        %1241 = vmatmul.mubr.f32.gmra.mrb[0].mxu0 %v956
        %v1242 = vpop.f32.mrb[0].mxu0
        %v1243 = vadd.f32 0.0, %v1242
        %v1244 = vpop.f32.mrb[0].mxu0
        %1245 = vmatprep.mubr.f32.mxu0 %v961
        %1246 = vmatmul.mubr.f32.gmra.mrb[0].mxu0 %v960
        %v1247 = vpop.f32.mrb[0].mxu0
        %v1248 = vadd.f32 0.0, %v1247
        %v1249 = vpop.f32.mrb[0].mxu0
        %1250 = vmatprep.mubr.f32.mxu0 %v965
        %1251 = vmatmul.mubr.f32.gmra.mrb[0].mxu0 %v964
        %v1252 = vpop.f32.mrb[0].mxu0
        %v1253 = vadd.f32 0.0, %v1252
        %v1254 = vpop.f32.mrb[0].mxu0
        %1255 = vmatprep.mubr.f32.mxu0 %v969
        %1256 = vmatmul.mubr.f32.gmra.mrb[0].mxu0 %v968
        %v1257 = vpop.f32.mrb[0].mxu0
        %v1258 = vadd.f32 0.0, %v1257
        %v1259 = vpop.f32.mrb[0].mxu0
        %1260 = vdwg.mxu0
        %1261 = vmatprep.subr.mxu0 0.0
        %1262 = vmatpush1.msra.mxu0 %v1004
        %1263 = vmatprep.subr.mxu0 0.0
        %1264 = vmatpush1.msra.mxu0 %v1005
        %1265 = vmatprep.subr.mxu0 0.0
        %1266 = vmatpush1.msra.mxu0 %v1006
        %1267 = vmatprep.subr.mxu0 0.0
        %1268 = vmatpush1.msra.mxu0 %v1007
        %1269 = vmatprep.subr.mxu0 0.0
        %1270 = vmatpush1.msra.mxu0 %v1008
        %1271 = vmatprep.subr.mxu0 0.0
        %1272 = vmatpush1.msra.mxu0 %v1009
        %1273 = vmatprep.subr.mxu0 0.0
        %1274 = vmatpush1.msra.mxu0 %v1010
        %1275 = vmatprep.subr.mxu0 0.0
        %1276 = vmatpush1.msra.mxu0 %v1011
        %1277 = vmatprep.subr.mxu0 0.0
        %1278 = vmatpush1.msra.mxu0 %v1012
        %1279 = vmatprep.subr.mxu0 0.0
        %1280 = vmatpush1.msra.mxu0 %v1013
        %1281 = vmatprep.subr.mxu0 0.0
        %1282 = vmatpush1.msra.mxu0 %v1014
        %1283 = vmatprep.subr.mxu0 0.0
        %1284 = vmatpush1.msra.mxu0 %v1015
        %1285 = vmatprep.subr.mxu0 0.0
        %1286 = vmatpush1.msra.mxu0 %v1016
        %1287 = vmatprep.subr.mxu0 0.0
        %1288 = vmatpush1.msra.mxu0 %v1017
        %1289 = vmatprep.subr.mxu0 0.0
        %1290 = vmatpush1.msra.mxu0 %v1018
        %1291 = vmatprep.subr.mxu0 0.0
        %1292 = vmatpush1.msra.mxu0 %v1019
        %1293 = vmatprep.subr.mxu0 0.0
        %1294 = vmatpush1.msra.mxu0 %v1020
        %1295 = vmatprep.subr.mxu0 0.0
        %1296 = vmatpush1.msra.mxu0 %v1021
        %1297 = vmatprep.subr.mxu0 0.0
        %1298 = vmatpush1.msra.mxu0 %v1022
        %1299 = vmatprep.subr.mxu0 0.0
        %1300 = vmatpush1.msra.mxu0 %v1023
        %1301 = vmatprep.subr.mxu0 0.0
        %1302 = vmatpush1.msra.mxu0 %v1024
        %1303 = vmatprep.subr.mxu0 0.0
        %1304 = vmatpush1.msra.mxu0 %v1025
        %1305 = vmatprep.subr.mxu0 0.0
        %1306 = vmatpush1.msra.mxu0 %v1026
        %1307 = vmatprep.subr.mxu0 0.0
        %1308 = vmatpush1.msra.mxu0 %v1027
        %1309 = vmatprep.subr.mxu0 0.0
        %1310 = vmatpush1.msra.mxu0 %v1028
        %1311 = vmatprep.subr.mxu0 0.0
        %1312 = vmatpush1.msra.mxu0 %v1029
        %1313 = vmatprep.subr.mxu0 0.0
        %1314 = vmatpush1.msra.mxu0 %v1030
        %1315 = vmatprep.subr.mxu0 0.0
        %1316 = vmatpush1.msra.mxu0 %v1031
        %1317 = vmatprep.subr.mxu0 0.0
        %1318 = vmatpush1.msra.mxu0 %v1032
        %1319 = vmatprep.subr.mxu0 0.0
        %1320 = vmatpush1.msra.mxu0 %v1033
        %1321 = vmatprep.subr.mxu0 0.0
        %1322 = vmatpush1.msra.mxu0 %v1034
        %1323 = vmatprep.subr.mxu0 0.0
        %1324 = vmatpush1.msra.mxu0 %v1035
        %1325 = vmatprep.mubr.f32.mxu0 %v847
        %1326 = vmatmul.mubr.f32.gmra.mrb[0].mxu0 %v846
        %v1327 = vpop.f32.mrb[0].mxu0
        %v1328 = vadd.f32 %v1103, %v1327
        %v1329 = vpop.f32.mrb[0].mxu0
        %1330 = vmatprep.mubr.f32.mxu0 %v851
        %1331 = vmatmul.mubr.f32.gmra.mrb[0].mxu0 %v850
        %v1332 = vpop.f32.mrb[0].mxu0
        %v1333 = vadd.f32 %v1108, %v1332
        %v1334 = vpop.f32.mrb[0].mxu0
        %1335 = vmatprep.mubr.f32.mxu0 %v855
        %1336 = vmatmul.mubr.f32.gmra.mrb[0].mxu0 %v854
        %v1337 = vpop.f32.mrb[0].mxu0
        %v1338 = vadd.f32 %v1113, %v1337
        %v1339 = vpop.f32.mrb[0].mxu0
        %1340 = vmatprep.mubr.f32.mxu0 %v859
        %1341 = vmatmul.mubr.f32.gmra.mrb[0].mxu0 %v858
        %v1342 = vpop.f32.mrb[0].mxu0
        %v1343 = vadd.f32 %v1118, %v1342
        %v1344 = vpop.f32.mrb[0].mxu0
        %1345 = vmatprep.mubr.f32.mxu0 %v863
        %1346 = vmatmul.mubr.f32.gmra.mrb[0].mxu0 %v862
        %v1347 = vpop.f32.mrb[0].mxu0
        %v1348 = vadd.f32 %v1123, %v1347
        %v1349 = vpop.f32.mrb[0].mxu0
        %1350 = vmatprep.mubr.f32.mxu0 %v867
        %1351 = vmatmul.mubr.f32.gmra.mrb[0].mxu0 %v866
        %v1352 = vpop.f32.mrb[0].mxu0
        %v1353 = vadd.f32 %v1128, %v1352
        %v1354 = vpop.f32.mrb[0].mxu0
        %1355 = vmatprep.mubr.f32.mxu0 %v871
        %1356 = vmatmul.mubr.f32.gmra.mrb[0].mxu0 %v870
        %v1357 = vpop.f32.mrb[0].mxu0
        %v1358 = vadd.f32 %v1133, %v1357
        %v1359 = vpop.f32.mrb[0].mxu0
        %1360 = vmatprep.mubr.f32.mxu0 %v875
        %1361 = vmatmul.mubr.f32.gmra.mrb[0].mxu0 %v874
        %v1362 = vpop.f32.mrb[0].mxu0
        %v1363 = vadd.f32 %v1138, %v1362
        %v1364 = vpop.f32.mrb[0].mxu0
        %1365 = vmatprep.mubr.f32.mxu0 %v879
        %1366 = vmatmul.mubr.f32.gmra.mrb[0].mxu0 %v878
        %v1367 = vpop.f32.mrb[0].mxu0
        %v1368 = vadd.f32 %v1143, %v1367
        %v1369 = vpop.f32.mrb[0].mxu0
        %1370 = vmatprep.mubr.f32.mxu0 %v883
        %1371 = vmatmul.mubr.f32.gmra.mrb[0].mxu0 %v882
        %v1372 = vpop.f32.mrb[0].mxu0
        %v1373 = vadd.f32 %v1148, %v1372
        %v1374 = vpop.f32.mrb[0].mxu0
        %1375 = vmatprep.mubr.f32.mxu0 %v887
        %1376 = vmatmul.mubr.f32.gmra.mrb[0].mxu0 %v886
        %v1377 = vpop.f32.mrb[0].mxu0
        %v1378 = vadd.f32 %v1153, %v1377
        %v1379 = vpop.f32.mrb[0].mxu0
        %1380 = vmatprep.mubr.f32.mxu0 %v891
        %1381 = vmatmul.mubr.f32.gmra.mrb[0].mxu0 %v890
        %v1382 = vpop.f32.mrb[0].mxu0
        %v1383 = vadd.f32 %v1158, %v1382
        %v1384 = vpop.f32.mrb[0].mxu0
        %1385 = vmatprep.mubr.f32.mxu0 %v895
        %1386 = vmatmul.mubr.f32.gmra.mrb[0].mxu0 %v894
        %v1387 = vpop.f32.mrb[0].mxu0
        %v1388 = vadd.f32 %v1163, %v1387
        %v1389 = vpop.f32.mrb[0].mxu0
        %1390 = vmatprep.mubr.f32.mxu0 %v899
        %1391 = vmatmul.mubr.f32.gmra.mrb[0].mxu0 %v898
        %v1392 = vpop.f32.mrb[0].mxu0
        %v1393 = vadd.f32 %v1168, %v1392
        %v1394 = vpop.f32.mrb[0].mxu0
        %1395 = vmatprep.mubr.f32.mxu0 %v903
        %1396 = vmatmul.mubr.f32.gmra.mrb[0].mxu0 %v902
        %v1397 = vpop.f32.mrb[0].mxu0
        %v1398 = vadd.f32 %v1173, %v1397
        %v1399 = vpop.f32.mrb[0].mxu0
        %1400 = vmatprep.mubr.f32.mxu0 %v907
        %1401 = vmatmul.mubr.f32.gmra.mrb[0].mxu0 %v906
        %v1402 = vpop.f32.mrb[0].mxu0
        %v1403 = vadd.f32 %v1178, %v1402
        %v1404 = vpop.f32.mrb[0].mxu0
        %1405 = vmatprep.mubr.f32.mxu0 %v911
        %1406 = vmatmul.mubr.f32.gmra.mrb[0].mxu0 %v910
        %v1407 = vpop.f32.mrb[0].mxu0
        %v1408 = vadd.f32 %v1183, %v1407
        %v1409 = vpop.f32.mrb[0].mxu0
        %1410 = vmatprep.mubr.f32.mxu0 %v915
        %1411 = vmatmul.mubr.f32.gmra.mrb[0].mxu0 %v914
        %v1412 = vpop.f32.mrb[0].mxu0
        %v1413 = vadd.f32 %v1188, %v1412
        %v1414 = vpop.f32.mrb[0].mxu0
        %1415 = vmatprep.mubr.f32.mxu0 %v919
        %1416 = vmatmul.mubr.f32.gmra.mrb[0].mxu0 %v918
        %v1417 = vpop.f32.mrb[0].mxu0
        %v1418 = vadd.f32 %v1193, %v1417
        %v1419 = vpop.f32.mrb[0].mxu0
        %1420 = vmatprep.mubr.f32.mxu0 %v923
        %1421 = vmatmul.mubr.f32.gmra.mrb[0].mxu0 %v922
        %v1422 = vpop.f32.mrb[0].mxu0
        %v1423 = vadd.f32 %v1198, %v1422
        %v1424 = vpop.f32.mrb[0].mxu0
        %1425 = vmatprep.mubr.f32.mxu0 %v927
        %1426 = vmatmul.mubr.f32.gmra.mrb[0].mxu0 %v926
        %v1427 = vpop.f32.mrb[0].mxu0
        %v1428 = vadd.f32 %v1203, %v1427
        %v1429 = vpop.f32.mrb[0].mxu0
        %1430 = vmatprep.mubr.f32.mxu0 %v931
        %1431 = vmatmul.mubr.f32.gmra.mrb[0].mxu0 %v930
        %v1432 = vpop.f32.mrb[0].mxu0
        %v1433 = vadd.f32 %v1208, %v1432
        %v1434 = vpop.f32.mrb[0].mxu0
        %1435 = vmatprep.mubr.f32.mxu0 %v935
        %1436 = vmatmul.mubr.f32.gmra.mrb[0].mxu0 %v934
        %v1437 = vpop.f32.mrb[0].mxu0
        %v1438 = vadd.f32 %v1213, %v1437
        %v1439 = vpop.f32.mrb[0].mxu0
        %1440 = vmatprep.mubr.f32.mxu0 %v939
        %1441 = vmatmul.mubr.f32.gmra.mrb[0].mxu0 %v938
        %v1442 = vpop.f32.mrb[0].mxu0
        %v1443 = vadd.f32 %v1218, %v1442
        %v1444 = vpop.f32.mrb[0].mxu0
        %1445 = vmatprep.mubr.f32.mxu0 %v943
        %1446 = vmatmul.mubr.f32.gmra.mrb[0].mxu0 %v942
        %v1447 = vpop.f32.mrb[0].mxu0
        %v1448 = vadd.f32 %v1223, %v1447
        %v1449 = vpop.f32.mrb[0].mxu0
        %1450 = vmatprep.mubr.f32.mxu0 %v947
        %1451 = vmatmul.mubr.f32.gmra.mrb[0].mxu0 %v946
        %v1452 = vpop.f32.mrb[0].mxu0
        %v1453 = vadd.f32 %v1228, %v1452
        %v1454 = vpop.f32.mrb[0].mxu0
        %1455 = vmatprep.mubr.f32.mxu0 %v951
        %1456 = vmatmul.mubr.f32.gmra.mrb[0].mxu0 %v950
        %v1457 = vpop.f32.mrb[0].mxu0
        %v1458 = vadd.f32 %v1233, %v1457
        %v1459 = vpop.f32.mrb[0].mxu0
        %1460 = vmatprep.mubr.f32.mxu0 %v955
        %1461 = vmatmul.mubr.f32.gmra.mrb[0].mxu0 %v954
        %v1462 = vpop.f32.mrb[0].mxu0
        %v1463 = vadd.f32 %v1238, %v1462
        %v1464 = vpop.f32.mrb[0].mxu0
        %1465 = vmatprep.mubr.f32.mxu0 %v959
        %1466 = vmatmul.mubr.f32.gmra.mrb[0].mxu0 %v958
        %v1467 = vpop.f32.mrb[0].mxu0
        %v1468 = vadd.f32 %v1243, %v1467
        %v1469 = vpop.f32.mrb[0].mxu0
        %1470 = vmatprep.mubr.f32.mxu0 %v963
        %1471 = vmatmul.mubr.f32.gmra.mrb[0].mxu0 %v962
        %v1472 = vpop.f32.mrb[0].mxu0
        %v1473 = vadd.f32 %v1248, %v1472
        %v1474 = vpop.f32.mrb[0].mxu0
        %1475 = vmatprep.mubr.f32.mxu0 %v967
        %1476 = vmatmul.mubr.f32.gmra.mrb[0].mxu0 %v966
        %v1477 = vpop.f32.mrb[0].mxu0
        %v1478 = vadd.f32 %v1253, %v1477
        %v1479 = vpop.f32.mrb[0].mxu0
        %1480 = vmatprep.mubr.f32.mxu0 %v971
        %1481 = vmatmul.mubr.f32.gmra.mrb[0].mxu0 %v970
        %v1482 = vpop.f32.mrb[0].mxu0
        %v1483 = vadd.f32 %v1258, %v1482
        %v1484 = vpop.f32.mrb[0].mxu0
        %1485 = vdwg.mxu0
        %vm1486 = vcmp.gt.f32.partialorder %v1328, 0.0
        %vm1487 = vcmp.gt.f32.partialorder %v1333, 0.0
        %vm1488 = vcmp.gt.f32.partialorder %v1338, 0.0
        %vm1489 = vcmp.gt.f32.partialorder %v1343, 0.0
        %vm1490 = vcmp.gt.f32.partialorder %v1348, 0.0
        %vm1491 = vcmp.gt.f32.partialorder %v1353, 0.0
        %vm1492 = vcmp.gt.f32.partialorder %v1358, 0.0
        %vm1493 = vcmp.gt.f32.partialorder %v1363, 0.0
        %vm1494 = vcmp.gt.f32.partialorder %v1368, 0.0
        %vm1495 = vcmp.gt.f32.partialorder %v1373, 0.0
        %vm1496 = vcmp.gt.f32.partialorder %v1378, 0.0
        %vm1497 = vcmp.gt.f32.partialorder %v1383, 0.0
        %vm1498 = vcmp.gt.f32.partialorder %v1388, 0.0
        %vm1499 = vcmp.gt.f32.partialorder %v1393, 0.0
        %vm1500 = vcmp.gt.f32.partialorder %v1398, 0.0
        %vm1501 = vcmp.gt.f32.partialorder %v1403, 0.0
        %vm1502 = vcmp.gt.f32.partialorder %v1408, 0.0
        %vm1503 = vcmp.gt.f32.partialorder %v1413, 0.0
        %vm1504 = vcmp.gt.f32.partialorder %v1418, 0.0
        %vm1505 = vcmp.gt.f32.partialorder %v1423, 0.0
        %vm1506 = vcmp.gt.f32.partialorder %v1428, 0.0
        %vm1507 = vcmp.gt.f32.partialorder %v1433, 0.0
        %vm1508 = vcmp.gt.f32.partialorder %v1438, 0.0
        %vm1509 = vcmp.gt.f32.partialorder %v1443, 0.0
        %vm1510 = vcmp.gt.f32.partialorder %v1448, 0.0
        %vm1511 = vcmp.gt.f32.partialorder %v1453, 0.0
        %vm1512 = vcmp.gt.f32.partialorder %v1458, 0.0
        %vm1513 = vcmp.gt.f32.partialorder %v1463, 0.0
        %vm1514 = vcmp.gt.f32.partialorder %v1468, 0.0
        %vm1515 = vcmp.gt.f32.partialorder %v1473, 0.0
        %vm1516 = vcmp.gt.f32.partialorder %v1478, 0.0
        %vm1517 = vcmp.gt.f32.partialorder %v1483, 0.0
        %v1518 = vmul.f32 %v1328, 0.01
        %v1519 = vmul.f32 %v1333, 0.01
        %v1520 = vmul.f32 %v1338, 0.01
        %v1521 = vmul.f32 %v1343, 0.01
        %v1522 = vmul.f32 %v1348, 0.01
        %v1523 = vmul.f32 %v1353, 0.01
        %v1524 = vmul.f32 %v1358, 0.01
        %v1525 = vmul.f32 %v1363, 0.01
        %v1526 = vmul.f32 %v1368, 0.01
        %v1527 = vmul.f32 %v1373, 0.01
        %v1528 = vmul.f32 %v1378, 0.01
        %v1529 = vmul.f32 %v1383, 0.01
        %v1530 = vmul.f32 %v1388, 0.01
        %v1531 = vmul.f32 %v1393, 0.01
        %v1532 = vmul.f32 %v1398, 0.01
        %v1533 = vmul.f32 %v1403, 0.01
        %v1534 = vmul.f32 %v1408, 0.01
        %v1535 = vmul.f32 %v1413, 0.01
        %v1536 = vmul.f32 %v1418, 0.01
        %v1537 = vmul.f32 %v1423, 0.01
        %v1538 = vmul.f32 %v1428, 0.01
        %v1539 = vmul.f32 %v1433, 0.01
        %v1540 = vmul.f32 %v1438, 0.01
        %v1541 = vmul.f32 %v1443, 0.01
        %v1542 = vmul.f32 %v1448, 0.01
        %v1543 = vmul.f32 %v1453, 0.01
        %v1544 = vmul.f32 %v1458, 0.01
        %v1545 = vmul.f32 %v1463, 0.01
        %v1546 = vmul.f32 %v1468, 0.01
        %v1547 = vmul.f32 %v1473, 0.01
        %v1548 = vmul.f32 %v1478, 0.01
        %v1549 = vmul.f32 %v1483, 0.01
        %v1550 = vsel %vm1486, %v1328, %v1518
        %v1551 = vsel %vm1487, %v1333, %v1519
        %v1552 = vsel %vm1488, %v1338, %v1520
        %v1553 = vsel %vm1489, %v1343, %v1521
        %v1554 = vsel %vm1490, %v1348, %v1522
        %v1555 = vsel %vm1491, %v1353, %v1523
        %v1556 = vsel %vm1492, %v1358, %v1524
        %v1557 = vsel %vm1493, %v1363, %v1525
        %v1558 = vsel %vm1494, %v1368, %v1526
        %v1559 = vsel %vm1495, %v1373, %v1527
        %v1560 = vsel %vm1496, %v1378, %v1528
        %v1561 = vsel %vm1497, %v1383, %v1529
        %v1562 = vsel %vm1498, %v1388, %v1530
        %v1563 = vsel %vm1499, %v1393, %v1531
        %v1564 = vsel %vm1500, %v1398, %v1532
        %v1565 = vsel %vm1501, %v1403, %v1533
        %v1566 = vsel %vm1502, %v1408, %v1534
        %v1567 = vsel %vm1503, %v1413, %v1535
        %v1568 = vsel %vm1504, %v1418, %v1536
        %v1569 = vsel %vm1505, %v1423, %v1537
        %v1570 = vsel %vm1506, %v1428, %v1538
        %v1571 = vsel %vm1507, %v1433, %v1539
        %v1572 = vsel %vm1508, %v1438, %v1540
        %v1573 = vsel %vm1509, %v1443, %v1541
        %v1574 = vsel %vm1510, %v1448, %v1542
        %v1575 = vsel %vm1511, %v1453, %v1543
        %v1576 = vsel %vm1512, %v1458, %v1544
        %v1577 = vsel %vm1513, %v1463, %v1545
        %v1578 = vsel %vm1514, %v1468, %v1546
        %v1579 = vsel %vm1515, %v1473, %v1547
        %v1580 = vsel %vm1516, %v1478, %v1548
        %v1581 = vsel %vm1517, %v1483, %v1549
        %1582 = vst [vmem:[%s301] sm:$0xff] %v1550
        %1583 = vst [vmem:[%s301 + $0x8] sm:$0xff] %v1551
        %1584 = vst [vmem:[%s301 + $0x10] sm:$0xff] %v1552
        %1585 = vst [vmem:[%s301 + $0x18] sm:$0xff] %v1553
        %1586 = vst [vmem:[%s301 + $0x20] sm:$0xff] %v1554
        %1587 = vst [vmem:[%s301 + $0x28] sm:$0xff] %v1555
        %1588 = vst [vmem:[%s301 + $0x30] sm:$0xff] %v1556
        %1589 = vst [vmem:[%s301 + $0x38] sm:$0xff] %v1557
        %1590 = vst [vmem:[%s301 + $0x40] sm:$0xff] %v1558
        %1591 = vst [vmem:[%s301 + $0x48] sm:$0xff] %v1559
        %1592 = vst [vmem:[%s301 + $0x50] sm:$0xff] %v1560
        %1593 = vst [vmem:[%s301 + $0x58] sm:$0xff] %v1561
        %1594 = vst [vmem:[%s301 + $0x60] sm:$0xff] %v1562
        %1595 = vst [vmem:[%s301 + $0x68] sm:$0xff] %v1563
        %1596 = vst [vmem:[%s301 + $0x70] sm:$0xff] %v1564
        %1597 = vst [vmem:[%s301 + $0x78] sm:$0xff] %v1565
        %1598 = vst [vmem:[%s301 + $0x80] sm:$0xff] %v1566
        %1599 = vst [vmem:[%s301 + $0x88] sm:$0xff] %v1567
        %1600 = vst [vmem:[%s301 + $0x90] sm:$0xff] %v1568
        %1601 = vst [vmem:[%s301 + $0x98] sm:$0xff] %v1569
        %1602 = vst [vmem:[%s301 + $0xa0] sm:$0xff] %v1570
        %1603 = vst [vmem:[%s301 + $0xa8] sm:$0xff] %v1571
        %1604 = vst [vmem:[%s301 + $0xb0] sm:$0xff] %v1572
        %1605 = vst [vmem:[%s301 + $0xb8] sm:$0xff] %v1573
        %1606 = vst [vmem:[%s301 + $0xc0] sm:$0xff] %v1574
        %1607 = vst [vmem:[%s301 + $0xc8] sm:$0xff] %v1575
        %1608 = vst [vmem:[%s301 + $0xd0] sm:$0xff] %v1576
        %1609 = vst [vmem:[%s301 + $0xd8] sm:$0xff] %v1577
        %1610 = vst [vmem:[%s301 + $0xe0] sm:$0xff] %v1578
        %1611 = vst [vmem:[%s301 + $0xe8] sm:$0xff] %v1579
        %1612 = vst [vmem:[%s301 + $0xf0] sm:$0xff] %v1580
        %1613 = vst [vmem:[%s301 + $0xf8] sm:$0xff] %v1581
        %s1614 = sand.u32 %s143, 1
        %s1615 = scalar_lea.sflag [#allocation5], %s1614
        %s1616 = sand.u32 %s143, 1
        %s1617 = smul.addr %s1616, 256
        %s1618 = scalar_lea.vmem [#allocation11], %s1617
        // Predicated region
        $region57: #{tpu_custom_call.1} parent=35 // pred_check
          %p1619 = pneg %p153
        $region58: #{tpu_custom_call.1} parent=35 // pred_check_branch
          %1621 = sbr.rel (%p1619) target = $region60
        $region59: #{tpu_custom_call.1} parent=35 // pred_region
          %s1622 = smul.u32 32, %s30
          %s1624 = ssub.s32 4096, 4096
          %1625 = vsyncadd %s1615, %s1624
          %s1626 = smul.addr %s29, 64
          %s1627 = sadd.s32 %s1622, %s1626
          %s1628 = smul.addr %s1627, 128
          %s1629 = scalar_lea.hbm %s4, %s1628
          %s1630 = sshll.u32 %s1618, 4
          %s1631 = int_to_ptr.vmem [resolvable:$true] %s1630
          %1636 = dma.vmem_to_hbm [thread:$0]  %s1631, 4096, %s1629, %s1615, 128, 128, 8
        $region60: #{tpu_custom_call.1} parent=35 // pred_fallthru
          _
      $region36: #{tpu_custom_call.1} parent=5 // pred_fallthru
        _
      %p1637 = scmp.le.s32.totalorder 2, %s20
      // Predicated region
      $region61: #{tpu_custom_call.1} parent=5 // pred_check
        %p1638 = pneg %p1637
      $region62: #{tpu_custom_call.1} parent=5 // pred_check_branch
        %1640 = sbr.rel (%p1638) target = $region64
      $region63: #{tpu_custom_call.1} parent=5 // pred_region
        %s1641 = ssub.s32 %s20, 2
        // Predicated region
        $region65: #{tpu_custom_call.1} parent=63 // pred_check
          %p1642 = pneg %p159
        $region66: #{tpu_custom_call.1} parent=63 // pred_check_branch
          %1644 = sbr.rel (%p1642) target = $region68
        $region67: #{tpu_custom_call.1} parent=63 // pred_region
          %s1645 = sand.u32 %s144, 1
          %s1646 = scalar_lea.sflag [#allocation5], %s1645
          %s1647 = sand.u32 %s144, 1
          %s1648 = smul.addr %s1647, 256
          %s1649 = scalar_lea.vmem [#allocation11], %s1648
          %1650 = dma.done %s1646, 4096
        $region68: #{tpu_custom_call.1} parent=63 // pred_fallthru
          _
      $region64: #{tpu_custom_call.1} parent=5 // pred_fallthru
        _
    $region6: #{tpu_custom_call.1} parent=1 // loop_footer
      %s24 = sadd.s32 1, %s20
    $region7: #{tpu_custom_call.1} parent=1 // loop_footer_branch
      %19 = sbr.rel target = $region3
    $region8: #{tpu_custom_call.1} parent=1 // loop_exit
      _
    %1651 = vsyncpa [#allocation4], 1
    %s1652 = scalar_lea.sflag [#allocation4], 1
    %1653 = vsyncpa %s1652, 1
    %1654 = vsyncpa [#allocation7], 1
    %s1655 = scalar_lea.sflag [#allocation7], 1
    %1656 = vsyncpa %s1655, 1
    %1657 = vsyncpa [#allocation10], 1
    %1658 = vsyncpa [#allocation5], 1
    %s1659 = scalar_lea.sflag [#allocation5], 1
    %1660 = vsyncpa %s1659, 1

</llo_original>
